<compile_context>
chip_gen: v7x
topology: tpu7x:2x2x1
jax: 0.10.0
libtpu: 0.0.40
codegen_flags: <defaults>
</compile_context>

<pallas_src>
import jax
import jax.numpy as jnp
from jax.experimental import pallas as pl
from jax.experimental.pallas import tpu as pltpu

_INV_SQRT2 = 0.7071067811865476


# --------------------------- in-kernel math helpers ---------------------------
def _erf_poly(x):
    """erf via Abramowitz & Stegun 7.1.26 (max abs error ~1.5e-7).

    Avoids lax.erf (no Pallas/Mosaic lowering); only uses exp / mul / add /
    select, all of which map to EUP/VPU slots.
    """
    p = 0.3275911
    a1, a2, a3, a4, a5 = (0.254829592, -0.284496736, 1.421413741,
                          -1.453152027, 1.061405429)
    ax = jnp.abs(x)
    t = 1.0 / (1.0 + p * ax)
    poly = ((((a5 * t + a4) * t + a3) * t + a2) * t + a1) * t
    y = 1.0 - poly * jnp.exp(-ax * ax)
    return jnp.where(x >= 0, y, -y)


def _gelu(x):
    # Matches torch.nn.GELU(approximate='none') to ~1e-7.
    return 0.5 * x * (1.0 + _erf_poly(x * _INV_SQRT2))


# --------------------------------- kernel ------------------------------------
def _build_kernel(n_levels, bt):
    n_steps = n_levels - 1

    def kernel(*refs):
        # refs layout:
        #   [0, n_levels)                    trend levels, coarsest first, (BT, TC, T_j)
        #   [n_levels, n_levels + 4*n_steps) (w1, b1, w2, b2) per step (VMEM resident)
        #   [n_levels + 4*n_steps, ...)      outputs, coarsest first, (BT, T_j, TC)
        x_refs = refs[:n_levels]
        p_refs = refs[n_levels:n_levels + 4 * n_steps]
        o_refs = refs[n_levels + 4 * n_steps:]

        # Static unroll over the batch tile: each element runs the whole
        # mixing chain with its running state kept in f32 vregs.
        for b in range(bt):
            state = x_refs[0][b].astype(jnp.float32)                 # (TC, T_0)
            o_refs[0][b] = jnp.transpose(state).astype(o_refs[0].dtype)

            for i in range(n_steps):
                w1, b1, w2, b2 = p_refs[4 * i:4 * i + 4]
                h = jnp.dot(state, w1[...],
                            preferred_element_type=jnp.float32) + b1[...]
                h = _gelu(h)
                y = jnp.dot(h, w2[...],
                            preferred_element_type=jnp.float32) + b2[...]
                # out_high = skip + residual ; out_low = out_high
                state = x_refs[i + 1][b].astype(jnp.float32) + y
                o_refs[i + 1][b] = jnp.transpose(state).astype(o_refs[i + 1].dtype)

    return kernel


# ------------------------------- tiling helpers -------------------------------
def _pick_channel_tile(c):
    """Full C unless C is large and 128-aligned (then tile for lane-dense stores)."""
    if c % 128 == 0:
        for cand in (512, 256, 128):
            if c % cand == 0:
                return cand
    return c


def _largest_divisor_leq(n, cap):
    cap = max(1, min(int(n), int(cap)))
    for d in range(cap, 0, -1):
        if n % d == 0:
            return d
    return 1


# --------------------------------- wrapper ------------------------------------
def trend_multi_scale_trend_mixing(trend_list, params):
    """Fused Pallas implementation of TrendMultiScaleTrendMixing.forward.

    trend_list: list of (B, C, T_i), finest (largest T) first, T_i = seq_len // dsw**i.
    params[j] = (w1, b1, w2, b2) for up_sampling_layers[j]; w stored as (in, out)
    (i.e. the transpose of torch.nn.Linear.weight).
    Returns list of (B, T_i, C), finest first (same order as the PyTorch module).
    """
    assert len(trend_list) >= 2, "need at least two scales"
    rev = list(trend_list)[::-1]                  # coarsest first
    n_levels = len(rev)
    n_steps = n_levels - 1
    assert len(params) == n_steps

    B, C, _ = (int(s) for s in rev[0].shape)
    dtype = rev[0].dtype                          # outputs keep the input dtype
    Ts = [int(x.shape[-1]) for x in rev]

    TC = _pick_channel_tile(C)

    # Batch tile: amortize per-grid-step overhead on this HBM-bound kernel.
    # Budget the (in + out) x double-buffered block bytes to ~24 MiB, cap the
    # static unroll at 8, and require BT | B so every block is full.
    itemsize = jnp.dtype(dtype).itemsize
    per_b_bytes = 2 * 2 * TC * sum(Ts) * itemsize
    bt_cap = max(1, (24 * 1024 * 1024) // max(per_b_bytes, 1))
    BT = _largest_divisor_leq(B, min(8, bt_cap))

    grid = (B // BT, C // TC)

    flat_inputs = list(rev)
    in_specs = [pl.BlockSpec((BT, TC, t), lambda b, c: (b, c, 0)) for t in Ts]
    for i in range(n_steps):
        w1, b1, w2, b2 = params[i]
        t_in, t_out = int(w1.shape[0]), int(w1.shape[1])
        flat_inputs += [w1, jnp.reshape(b1, (1, t_out)),
                        w2, jnp.reshape(b2, (1, t_out))]
        in_specs += [
            pl.BlockSpec((t_in, t_out), lambda b, c: (0, 0)),   # resident weights
            pl.BlockSpec((1, t_out), lambda b, c: (0, 0)),
            pl.BlockSpec((t_out, t_out), lambda b, c: (0, 0)),
            pl.BlockSpec((1, t_out), lambda b, c: (0, 0)),
        ]

    out_shapes = tuple(jax.ShapeDtypeStruct((B, t, C), dtype) for t in Ts)
    out_specs = tuple(pl.BlockSpec((BT, t, TC), lambda b, c: (b, 0, c)) for t in Ts)

    outs = pl.pallas_call(
        _build_kernel(n_levels, BT),
        out_shape=out_shapes,
        grid=grid,
        in_specs=in_specs,
        out_specs=out_specs,
        compiler_params=pltpu.CompilerParams(
            # No cross-grid accumulation: both axes may shard across TensorCores
            # (v7x megacore); harmless no-op on single-TC v5e/v6e.
            dimension_semantics=("parallel", "parallel"),
            # Blocks are budgeted to ~24 MiB; stay well under v7x's 64 MiB VMEM.
            vmem_limit_bytes=48 * 1024 * 1024,
        ),
    )(*flat_inputs)

    out_list = list(outs)     # coarsest first
    out_list.reverse()        # finest first, matching the module's return order
    return out_list


# ----------------------- pure-JAX reference (for checking) --------------------
def _ref_forward(trend_list, params):
    rev = list(trend_list)[::-1]
    out_low = rev[0]
    out_high = rev[1]
    outs = [jnp.transpose(out_low, (0, 2, 1))]
    n_steps = len(rev) - 1
    for i in range(n_steps):
        w1, b1, w2, b2 = params[i]
        h = out_low @ w1 + b1
        h = 0.5 * h * (1.0 + jax.lax.erf(h * _INV_SQRT2))   # exact GELU
        res = h @ w2 + b2
        out_high = out_high + res
        out_low = out_high
        if i + 2 <= n_steps:
            out_high = rev[i + 2]
        outs.append(jnp.transpose(out_low, (0, 2, 1)))
    outs.reverse()
    return outs


if __name__ == "__main__":
    # configs: seq_len=16, down_sampling_window=2, down_sampling_layers=2
    seq_len, dsw, n_layers = 16, 2, 2
    B, C = 2, 4
    Ts = [seq_len // dsw ** i for i in range(n_layers + 1)]  # [16, 8, 4]

    key = jax.random.PRNGKey(0)

    # up_sampling_layers[j]: Linear(Ts[L-j] -> Ts[L-1-j]), GELU, Linear(Ts[L-1-j] -> Ts[L-1-j])
    params = []
    for j in range(n_layers):
        t_in, t_out = Ts[n_layers - j], Ts[n_layers - 1 - j]
        key, k1, k2, k3, k4 = jax.random.split(key, 5)
        w1 = jax.random.normal(k1, (t_in, t_out), jnp.float32) / jnp.sqrt(float(t_in))
        b1 = 0.01 * jax.random.normal(k2, (1, t_out), jnp.float32)
        w2 = jax.random.normal(k3, (t_out, t_out), jnp.float32) / jnp.sqrt(float(t_out))
        b2 = 0.01 * jax.random.normal(k4, (1, t_out), jnp.float32)
        params.append((w1, b1, w2, b2))

    trend_list = []
    for t in Ts:
        key, k = jax.random.split(key)
        trend_list.append(jax.random.normal(k, (B, C, t), jnp.float32))

    outs = trend_multi_scale_trend_mixing(trend_list, params)
    outs = [jax.block_until_ready(o) for o in outs]

    refs = _ref_forward(trend_list, params)
    for o, r in zip(outs, refs):
        assert o.shape == r.shape, (o.shape, r.shape)
        assert o.dtype == r.dtype, (o.dtype, r.dtype)
        assert jnp.allclose(o, r, atol=5e-5, rtol=5e-5), float(jnp.max(jnp.abs(o - r)))

    print("KERNEL_OK")
</pallas_src>

<mosaic_0001>
module attributes {stable_mosaic.version = 11 : i64} {
  func.func @kernel(%arg0: i32, %arg1: i32, %arg2: memref<2x4x4xf32, #tpu.memory_space<vmem>>, %arg3: memref<2x4x8xf32, #tpu.memory_space<vmem>>, %arg4: memref<2x4x16xf32, #tpu.memory_space<vmem>>, %arg5: memref<4x8xf32, #tpu.memory_space<vmem>>, %arg6: memref<1x8xf32, #tpu.memory_space<vmem>>, %arg7: memref<8x8xf32, #tpu.memory_space<vmem>>, %arg8: memref<1x8xf32, #tpu.memory_space<vmem>>, %arg9: memref<8x16xf32, #tpu.memory_space<vmem>>, %arg10: memref<1x16xf32, #tpu.memory_space<vmem>>, %arg11: memref<16x16xf32, #tpu.memory_space<vmem>>, %arg12: memref<1x16xf32, #tpu.memory_space<vmem>>, %arg13: memref<2x4x4xf32, #tpu.memory_space<vmem>>, %arg14: memref<2x8x4xf32, #tpu.memory_space<vmem>>, %arg15: memref<2x16x4xf32, #tpu.memory_space<vmem>>) attributes {dimension_semantics = [#tpu.dimension_semantics<parallel>, #tpu.dimension_semantics<parallel>], iteration_bounds = array<i64: 1, 1>, scalar_prefetch = 0 : i64, scratch_operands = 0 : i64, tpu.core_type = #tpu.core_type<tc>, window_params = [{transform_indices = @transform_0, window_bounds = array<i64: 2, 4, 4>}, {transform_indices = @transform_1, window_bounds = array<i64: 2, 4, 8>}, {transform_indices = @transform_2, window_bounds = array<i64: 2, 4, 16>}, {pipeline_mode = #tpu.pipeline_mode<synchronous>, transform_indices = @transform_3, window_bounds = array<i64: 4, 8>}, {pipeline_mode = #tpu.pipeline_mode<synchronous>, transform_indices = @transform_4, window_bounds = array<i64: 1, 8>}, {pipeline_mode = #tpu.pipeline_mode<synchronous>, transform_indices = @transform_5, window_bounds = array<i64: 8, 8>}, {pipeline_mode = #tpu.pipeline_mode<synchronous>, transform_indices = @transform_6, window_bounds = array<i64: 1, 8>}, {pipeline_mode = #tpu.pipeline_mode<synchronous>, transform_indices = @transform_7, window_bounds = array<i64: 8, 16>}, {pipeline_mode = #tpu.pipeline_mode<synchronous>, transform_indices = @transform_8, window_bounds = array<i64: 1, 16>}, {pipeline_mode = #tpu.pipeline_mode<synchronous>, transform_indices = @transform_9, window_bounds = array<i64: 16, 16>}, {pipeline_mode = #tpu.pipeline_mode<synchronous>, transform_indices = @transform_10, window_bounds = array<i64: 1, 16>}, {transform_indices = @transform_11, window_bounds = array<i64: 2, 4, 4>}, {transform_indices = @transform_12, window_bounds = array<i64: 2, 8, 4>}, {transform_indices = @transform_13, window_bounds = array<i64: 2, 16, 4>}]} {
    %c0 = arith.constant 0 : index
    %c0_0 = arith.constant 0 : index
    %c0_1 = arith.constant 0 : index
    %0 = vector.load %arg2[%c0, %c0_0, %c0_1] : memref<2x4x4xf32, #tpu.memory_space<vmem>>, vector<1x4x4xf32>
    %1 = vector.shape_cast %0 : vector<1x4x4xf32> to vector<4x4xf32>
    %2 = tpu.transpose %1, [1, 0] : vector<4x4xf32> -> vector<4x4xf32>
    %c0_2 = arith.constant 0 : index
    %c0_3 = arith.constant 0 : index
    %c0_4 = arith.constant 0 : index
    %3 = vector.load %arg13[%c0_2, %c0_3, %c0_4] : memref<2x4x4xf32, #tpu.memory_space<vmem>>, vector<1x4x4xf32>
    %4 = vector.shape_cast %3 : vector<1x4x4xf32> to vector<4x4xf32>
    %5 = vector.shape_cast %2 : vector<4x4xf32> to vector<1x4x4xf32>
    tpu.vector_store %arg13[%c0_2, %c0_3, %c0_4], %5 {strides = array<i32>} : memref<2x4x4xf32, #tpu.memory_space<vmem>>, vector<1x4x4xf32>,
    %c0_5 = arith.constant 0 : index
    %c0_6 = arith.constant 0 : index
    %6 = vector.load %arg5[%c0_5, %c0_6] : memref<4x8xf32, #tpu.memory_space<vmem>>, vector<4x8xf32>
    %cst = arith.constant dense<0.000000e+00> : vector<4x8xf32>
    %7 = tpu.matmul %1, %6, %cst {dimension_numbers = #tpu.dot_dimension_numbers<[1], [0], [0], [1], [0, 0, 1, 1], [], []>} : vector<4x4xf32>, vector<4x8xf32>, vector<4x8xf32> -> vector<4x8xf32>
    %c0_7 = arith.constant 0 : index
    %c0_8 = arith.constant 0 : index
    %8 = vector.load %arg6[%c0_7, %c0_8] : memref<1x8xf32, #tpu.memory_space<vmem>>, vector<1x8xf32>
    %9 = vector.broadcast %8 : vector<1x8xf32> to vector<4x8xf32>
    %10 = arith.addf %7, %9 : vector<4x8xf32>
    %cst_9 = arith.constant 5.000000e-01 : f32
    %11 = vector.broadcast %cst_9 : f32 to vector<4x8xf32>
    %12 = arith.mulf %11, %10 : vector<4x8xf32>
    %cst_10 = arith.constant 0.707106769 : f32
    %13 = vector.broadcast %cst_10 : f32 to vector<4x8xf32>
    %14 = arith.mulf %10, %13 : vector<4x8xf32>
    %15 = math.absf %14 : vector<4x8xf32>
    %cst_11 = arith.constant 0.327591091 : f32
    %16 = vector.broadcast %cst_11 : f32 to vector<4x8xf32>
    %17 = arith.mulf %16, %15 : vector<4x8xf32>
    %cst_12 = arith.constant 1.000000e+00 : f32
    %18 = vector.broadcast %cst_12 : f32 to vector<4x8xf32>
    %19 = arith.addf %18, %17 : vector<4x8xf32>
    %cst_13 = arith.constant 1.000000e+00 : f32
    %20 = vector.broadcast %cst_13 : f32 to vector<4x8xf32>
    %21 = arith.divf %20, %19 : vector<4x8xf32>
    %cst_14 = arith.constant 1.06140542 : f32
    %22 = vector.broadcast %cst_14 : f32 to vector<4x8xf32>
    %23 = arith.mulf %22, %21 : vector<4x8xf32>
    %cst_15 = arith.constant -1.45315206 : f32
    %24 = vector.broadcast %cst_15 : f32 to vector<4x8xf32>
    %25 = arith.addf %23, %24 : vector<4x8xf32>
    %26 = arith.mulf %25, %21 : vector<4x8xf32>
    %cst_16 = arith.constant 1.42141378 : f32
    %27 = vector.broadcast %cst_16 : f32 to vector<4x8xf32>
    %28 = arith.addf %26, %27 : vector<4x8xf32>
    %29 = arith.mulf %28, %21 : vector<4x8xf32>
    %cst_17 = arith.constant -0.284496725 : f32
    %30 = vector.broadcast %cst_17 : f32 to vector<4x8xf32>
    %31 = arith.addf %29, %30 : vector<4x8xf32>
    %32 = arith.mulf %31, %21 : vector<4x8xf32>
    %cst_18 = arith.constant 0.254829586 : f32
    %33 = vector.broadcast %cst_18 : f32 to vector<4x8xf32>
    %34 = arith.addf %32, %33 : vector<4x8xf32>
    %35 = arith.mulf %34, %21 : vector<4x8xf32>
    %cst_19 = arith.constant 0.000000e+00 : f32
    %36 = vector.broadcast %cst_19 : f32 to vector<4x8xf32>
    %37 = arith.subf %36, %15 : vector<4x8xf32>
    %38 = arith.mulf %37, %15 : vector<4x8xf32>
    %39 = math.exp %38 : vector<4x8xf32>
    %40 = arith.mulf %35, %39 : vector<4x8xf32>
    %cst_20 = arith.constant 1.000000e+00 : f32
    %41 = vector.broadcast %cst_20 : f32 to vector<4x8xf32>
    %42 = arith.subf %41, %40 : vector<4x8xf32>
    %cst_21 = arith.constant 0.000000e+00 : f32
    %43 = vector.broadcast %cst_21 : f32 to vector<4x8xf32>
    %44 = arith.cmpf oge, %14, %43 : vector<4x8xf32>
    %cst_22 = arith.constant 0.000000e+00 : f32
    %45 = vector.broadcast %cst_22 : f32 to vector<4x8xf32>
    %46 = arith.subf %45, %42 : vector<4x8xf32>
    %47 = arith.select %44, %42, %46 : vector<4x8xi1>, vector<4x8xf32>
    %cst_23 = arith.constant 1.000000e+00 : f32
    %48 = vector.broadcast %cst_23 : f32 to vector<4x8xf32>
    %49 = arith.addf %48, %47 : vector<4x8xf32>
    %50 = arith.mulf %12, %49 : vector<4x8xf32>
    %c0_24 = arith.constant 0 : index
    %c0_25 = arith.constant 0 : index
    %51 = vector.load %arg7[%c0_24, %c0_25] : memref<8x8xf32, #tpu.memory_space<vmem>>, vector<8x8xf32>
    %cst_26 = arith.constant dense<0.000000e+00> : vector<4x8xf32>
    %52 = tpu.matmul %50, %51, %cst_26 {dimension_numbers = #tpu.dot_dimension_numbers<[1], [0], [0], [1], [0, 0, 1, 1], [], []>} : vector<4x8xf32>, vector<8x8xf32>, vector<4x8xf32> -> vector<4x8xf32>
    %c0_27 = arith.constant 0 : index
    %c0_28 = arith.constant 0 : index
    %53 = vector.load %arg8[%c0_27, %c0_28] : memref<1x8xf32, #tpu.memory_space<vmem>>, vector<1x8xf32>
    %54 = vector.broadcast %53 : vector<1x8xf32> to vector<4x8xf32>
    %55 = arith.addf %52, %54 : vector<4x8xf32>
    %c0_29 = arith.constant 0 : index
    %c0_30 = arith.constant 0 : index
    %c0_31 = arith.constant 0 : index
    %56 = vector.load %arg3[%c0_29, %c0_30, %c0_31] : memref<2x4x8xf32, #tpu.memory_space<vmem>>, vector<1x4x8xf32>
    %57 = vector.shape_cast %56 : vector<1x4x8xf32> to vector<4x8xf32>
    %58 = arith.addf %57, %55 : vector<4x8xf32>
    %59 = tpu.transpose %58, [1, 0] : vector<4x8xf32> -> vector<8x4xf32>
    %c0_32 = arith.constant 0 : index
    %c0_33 = arith.constant 0 : index
    %c0_34 = arith.constant 0 : index
    %60 = vector.load %arg14[%c0_32, %c0_33, %c0_34] : memref<2x8x4xf32, #tpu.memory_space<vmem>>, vector<1x8x4xf32>
    %61 = vector.shape_cast %60 : vector<1x8x4xf32> to vector<8x4xf32>
    %62 = vector.shape_cast %59 : vector<8x4xf32> to vector<1x8x4xf32>
    tpu.vector_store %arg14[%c0_32, %c0_33, %c0_34], %62 {strides = array<i32>} : memref<2x8x4xf32, #tpu.memory_space<vmem>>, vector<1x8x4xf32>,
    %c0_35 = arith.constant 0 : index
    %c0_36 = arith.constant 0 : index
    %63 = vector.load %arg9[%c0_35, %c0_36] : memref<8x16xf32, #tpu.memory_space<vmem>>, vector<8x16xf32>
    %cst_37 = arith.constant dense<0.000000e+00> : vector<4x16xf32>
    %64 = tpu.matmul %58, %63, %cst_37 {dimension_numbers = #tpu.dot_dimension_numbers<[1], [0], [0], [1], [0, 0, 1, 1], [], []>} : vector<4x8xf32>, vector<8x16xf32>, vector<4x16xf32> -> vector<4x16xf32>
    %c0_38 = arith.constant 0 : index
    %c0_39 = arith.constant 0 : index
    %65 = vector.load %arg10[%c0_38, %c0_39] : memref<1x16xf32, #tpu.memory_space<vmem>>, vector<1x16xf32>
    %66 = vector.broadcast %65 : vector<1x16xf32> to vector<4x16xf32>
    %67 = arith.addf %64, %66 : vector<4x16xf32>
    %cst_40 = arith.constant 5.000000e-01 : f32
    %68 = vector.broadcast %cst_40 : f32 to vector<4x16xf32>
    %69 = arith.mulf %68, %67 : vector<4x16xf32>
    %cst_41 = arith.constant 0.707106769 : f32
    %70 = vector.broadcast %cst_41 : f32 to vector<4x16xf32>
    %71 = arith.mulf %67, %70 : vector<4x16xf32>
    %72 = math.absf %71 : vector<4x16xf32>
    %cst_42 = arith.constant 0.327591091 : f32
    %73 = vector.broadcast %cst_42 : f32 to vector<4x16xf32>
    %74 = arith.mulf %73, %72 : vector<4x16xf32>
    %cst_43 = arith.constant 1.000000e+00 : f32
    %75 = vector.broadcast %cst_43 : f32 to vector<4x16xf32>
    %76 = arith.addf %75, %74 : vector<4x16xf32>
    %cst_44 = arith.constant 1.000000e+00 : f32
    %77 = vector.broadcast %cst_44 : f32 to vector<4x16xf32>
    %78 = arith.divf %77, %76 : vector<4x16xf32>
    %cst_45 = arith.constant 1.06140542 : f32
    %79 = vector.broadcast %cst_45 : f32 to vector<4x16xf32>
    %80 = arith.mulf %79, %78 : vector<4x16xf32>
    %cst_46 = arith.constant -1.45315206 : f32
    %81 = vector.broadcast %cst_46 : f32 to vector<4x16xf32>
    %82 = arith.addf %80, %81 : vector<4x16xf32>
    %83 = arith.mulf %82, %78 : vector<4x16xf32>
    %cst_47 = arith.constant 1.42141378 : f32
    %84 = vector.broadcast %cst_47 : f32 to vector<4x16xf32>
    %85 = arith.addf %83, %84 : vector<4x16xf32>
    %86 = arith.mulf %85, %78 : vector<4x16xf32>
    %cst_48 = arith.constant -0.284496725 : f32
    %87 = vector.broadcast %cst_48 : f32 to vector<4x16xf32>
    %88 = arith.addf %86, %87 : vector<4x16xf32>
    %89 = arith.mulf %88, %78 : vector<4x16xf32>
    %cst_49 = arith.constant 0.254829586 : f32
    %90 = vector.broadcast %cst_49 : f32 to vector<4x16xf32>
    %91 = arith.addf %89, %90 : vector<4x16xf32>
    %92 = arith.mulf %91, %78 : vector<4x16xf32>
    %cst_50 = arith.constant 0.000000e+00 : f32
    %93 = vector.broadcast %cst_50 : f32 to vector<4x16xf32>
    %94 = arith.subf %93, %72 : vector<4x16xf32>
    %95 = arith.mulf %94, %72 : vector<4x16xf32>
    %96 = math.exp %95 : vector<4x16xf32>
    %97 = arith.mulf %92, %96 : vector<4x16xf32>
    %cst_51 = arith.constant 1.000000e+00 : f32
    %98 = vector.broadcast %cst_51 : f32 to vector<4x16xf32>
    %99 = arith.subf %98, %97 : vector<4x16xf32>
    %cst_52 = arith.constant 0.000000e+00 : f32
    %100 = vector.broadcast %cst_52 : f32 to vector<4x16xf32>
    %101 = arith.cmpf oge, %71, %100 : vector<4x16xf32>
    %cst_53 = arith.constant 0.000000e+00 : f32
    %102 = vector.broadcast %cst_53 : f32 to vector<4x16xf32>
    %103 = arith.subf %102, %99 : vector<4x16xf32>
    %104 = arith.select %101, %99, %103 : vector<4x16xi1>, vector<4x16xf32>
    %cst_54 = arith.constant 1.000000e+00 : f32
    %105 = vector.broadcast %cst_54 : f32 to vector<4x16xf32>
    %106 = arith.addf %105, %104 : vector<4x16xf32>
    %107 = arith.mulf %69, %106 : vector<4x16xf32>
    %c0_55 = arith.constant 0 : index
    %c0_56 = arith.constant 0 : index
    %108 = vector.load %arg11[%c0_55, %c0_56] : memref<16x16xf32, #tpu.memory_space<vmem>>, vector<16x16xf32>
    %cst_57 = arith.constant dense<0.000000e+00> : vector<4x16xf32>
    %109 = tpu.matmul %107, %108, %cst_57 {dimension_numbers = #tpu.dot_dimension_numbers<[1], [0], [0], [1], [0, 0, 1, 1], [], []>} : vector<4x16xf32>, vector<16x16xf32>, vector<4x16xf32> -> vector<4x16xf32>
    %c0_58 = arith.constant 0 : index
    %c0_59 = arith.constant 0 : index
    %110 = vector.load %arg12[%c0_58, %c0_59] : memref<1x16xf32, #tpu.memory_space<vmem>>, vector<1x16xf32>
    %111 = vector.broadcast %110 : vector<1x16xf32> to vector<4x16xf32>
    %112 = arith.addf %109, %111 : vector<4x16xf32>
    %c0_60 = arith.constant 0 : index
    %c0_61 = arith.constant 0 : index
    %c0_62 = arith.constant 0 : index
    %113 = vector.load %arg4[%c0_60, %c0_61, %c0_62] : memref<2x4x16xf32, #tpu.memory_space<vmem>>, vector<1x4x16xf32>
    %114 = vector.shape_cast %113 : vector<1x4x16xf32> to vector<4x16xf32>
    %115 = arith.addf %114, %112 : vector<4x16xf32>
    %116 = tpu.transpose %115, [1, 0] : vector<4x16xf32> -> vector<16x4xf32>
    %c0_63 = arith.constant 0 : index
    %c0_64 = arith.constant 0 : index
    %c0_65 = arith.constant 0 : index
    %117 = vector.load %arg15[%c0_63, %c0_64, %c0_65] : memref<2x16x4xf32, #tpu.memory_space<vmem>>, vector<1x16x4xf32>
    %118 = vector.shape_cast %117 : vector<1x16x4xf32> to vector<16x4xf32>
    %119 = vector.shape_cast %116 : vector<16x4xf32> to vector<1x16x4xf32>
    tpu.vector_store %arg15[%c0_63, %c0_64, %c0_65], %119 {strides = array<i32>} : memref<2x16x4xf32, #tpu.memory_space<vmem>>, vector<1x16x4xf32>,
    %c1 = arith.constant 1 : index
    %c0_66 = arith.constant 0 : index
    %c0_67 = arith.constant 0 : index
    %120 = vector.load %arg2[%c1, %c0_66, %c0_67] : memref<2x4x4xf32, #tpu.memory_space<vmem>>, vector<1x4x4xf32>
    %121 = vector.shape_cast %120 : vector<1x4x4xf32> to vector<4x4xf32>
    %122 = tpu.transpose %121, [1, 0] : vector<4x4xf32> -> vector<4x4xf32>
    %c1_68 = arith.constant 1 : index
    %c0_69 = arith.constant 0 : index
    %c0_70 = arith.constant 0 : index
    %123 = vector.load %arg13[%c1_68, %c0_69, %c0_70] : memref<2x4x4xf32, #tpu.memory_space<vmem>>, vector<1x4x4xf32>
    %124 = vector.shape_cast %123 : vector<1x4x4xf32> to vector<4x4xf32>
    %125 = vector.shape_cast %122 : vector<4x4xf32> to vector<1x4x4xf32>
    tpu.vector_store %arg13[%c1_68, %c0_69, %c0_70], %125 {strides = array<i32>} : memref<2x4x4xf32, #tpu.memory_space<vmem>>, vector<1x4x4xf32>,
    %c0_71 = arith.constant 0 : index
    %c0_72 = arith.constant 0 : index
    %126 = vector.load %arg5[%c0_71, %c0_72] : memref<4x8xf32, #tpu.memory_space<vmem>>, vector<4x8xf32>
    %cst_73 = arith.constant dense<0.000000e+00> : vector<4x8xf32>
    %127 = tpu.matmul %121, %126, %cst_73 {dimension_numbers = #tpu.dot_dimension_numbers<[1], [0], [0], [1], [0, 0, 1, 1], [], []>} : vector<4x4xf32>, vector<4x8xf32>, vector<4x8xf32> -> vector<4x8xf32>
    %c0_74 = arith.constant 0 : index
    %c0_75 = arith.constant 0 : index
    %128 = vector.load %arg6[%c0_74, %c0_75] : memref<1x8xf32, #tpu.memory_space<vmem>>, vector<1x8xf32>
    %129 = vector.broadcast %128 : vector<1x8xf32> to vector<4x8xf32>
    %130 = arith.addf %127, %129 : vector<4x8xf32>
    %cst_76 = arith.constant 5.000000e-01 : f32
    %131 = vector.broadcast %cst_76 : f32 to vector<4x8xf32>
    %132 = arith.mulf %131, %130 : vector<4x8xf32>
    %cst_77 = arith.constant 0.707106769 : f32
    %133 = vector.broadcast %cst_77 : f32 to vector<4x8xf32>
    %134 = arith.mulf %130, %133 : vector<4x8xf32>
    %135 = math.absf %134 : vector<4x8xf32>
    %cst_78 = arith.constant 0.327591091 : f32
    %136 = vector.broadcast %cst_78 : f32 to vector<4x8xf32>
    %137 = arith.mulf %136, %135 : vector<4x8xf32>
    %cst_79 = arith.constant 1.000000e+00 : f32
    %138 = vector.broadcast %cst_79 : f32 to vector<4x8xf32>
    %139 = arith.addf %138, %137 : vector<4x8xf32>
    %cst_80 = arith.constant 1.000000e+00 : f32
    %140 = vector.broadcast %cst_80 : f32 to vector<4x8xf32>
    %141 = arith.divf %140, %139 : vector<4x8xf32>
    %cst_81 = arith.constant 1.06140542 : f32
    %142 = vector.broadcast %cst_81 : f32 to vector<4x8xf32>
    %143 = arith.mulf %142, %141 : vector<4x8xf32>
    %cst_82 = arith.constant -1.45315206 : f32
    %144 = vector.broadcast %cst_82 : f32 to vector<4x8xf32>
    %145 = arith.addf %143, %144 : vector<4x8xf32>
    %146 = arith.mulf %145, %141 : vector<4x8xf32>
    %cst_83 = arith.constant 1.42141378 : f32
    %147 = vector.broadcast %cst_83 : f32 to vector<4x8xf32>
    %148 = arith.addf %146, %147 : vector<4x8xf32>
    %149 = arith.mulf %148, %141 : vector<4x8xf32>
    %cst_84 = arith.constant -0.284496725 : f32
    %150 = vector.broadcast %cst_84 : f32 to vector<4x8xf32>
    %151 = arith.addf %149, %150 : vector<4x8xf32>
    %152 = arith.mulf %151, %141 : vector<4x8xf32>
    %cst_85 = arith.constant 0.254829586 : f32
    %153 = vector.broadcast %cst_85 : f32 to vector<4x8xf32>
    %154 = arith.addf %152, %153 : vector<4x8xf32>
    %155 = arith.mulf %154, %141 : vector<4x8xf32>
    %cst_86 = arith.constant 0.000000e+00 : f32
    %156 = vector.broadcast %cst_86 : f32 to vector<4x8xf32>
    %157 = arith.subf %156, %135 : vector<4x8xf32>
    %158 = arith.mulf %157, %135 : vector<4x8xf32>
    %159 = math.exp %158 : vector<4x8xf32>
    %160 = arith.mulf %155, %159 : vector<4x8xf32>
    %cst_87 = arith.constant 1.000000e+00 : f32
    %161 = vector.broadcast %cst_87 : f32 to vector<4x8xf32>
    %162 = arith.subf %161, %160 : vector<4x8xf32>
    %cst_88 = arith.constant 0.000000e+00 : f32
    %163 = vector.broadcast %cst_88 : f32 to vector<4x8xf32>
    %164 = arith.cmpf oge, %134, %163 : vector<4x8xf32>
    %cst_89 = arith.constant 0.000000e+00 : f32
    %165 = vector.broadcast %cst_89 : f32 to vector<4x8xf32>
    %166 = arith.subf %165, %162 : vector<4x8xf32>
    %167 = arith.select %164, %162, %166 : vector<4x8xi1>, vector<4x8xf32>
    %cst_90 = arith.constant 1.000000e+00 : f32
    %168 = vector.broadcast %cst_90 : f32 to vector<4x8xf32>
    %169 = arith.addf %168, %167 : vector<4x8xf32>
    %170 = arith.mulf %132, %169 : vector<4x8xf32>
    %c0_91 = arith.constant 0 : index
    %c0_92 = arith.constant 0 : index
    %171 = vector.load %arg7[%c0_91, %c0_92] : memref<8x8xf32, #tpu.memory_space<vmem>>, vector<8x8xf32>
    %cst_93 = arith.constant dense<0.000000e+00> : vector<4x8xf32>
    %172 = tpu.matmul %170, %171, %cst_93 {dimension_numbers = #tpu.dot_dimension_numbers<[1], [0], [0], [1], [0, 0, 1, 1], [], []>} : vector<4x8xf32>, vector<8x8xf32>, vector<4x8xf32> -> vector<4x8xf32>
    %c0_94 = arith.constant 0 : index
    %c0_95 = arith.constant 0 : index
    %173 = vector.load %arg8[%c0_94, %c0_95] : memref<1x8xf32, #tpu.memory_space<vmem>>, vector<1x8xf32>
    %174 = vector.broadcast %173 : vector<1x8xf32> to vector<4x8xf32>
    %175 = arith.addf %172, %174 : vector<4x8xf32>
    %c1_96 = arith.constant 1 : index
    %c0_97 = arith.constant 0 : index
    %c0_98 = arith.constant 0 : index
    %176 = vector.load %arg3[%c1_96, %c0_97, %c0_98] : memref<2x4x8xf32, #tpu.memory_space<vmem>>, vector<1x4x8xf32>
    %177 = vector.shape_cast %176 : vector<1x4x8xf32> to vector<4x8xf32>
    %178 = arith.addf %177, %175 : vector<4x8xf32>
    %179 = tpu.transpose %178, [1, 0] : vector<4x8xf32> -> vector<8x4xf32>
    %c1_99 = arith.constant 1 : index
    %c0_100 = arith.constant 0 : index
    %c0_101 = arith.constant 0 : index
    %180 = vector.load %arg14[%c1_99, %c0_100, %c0_101] : memref<2x8x4xf32, #tpu.memory_space<vmem>>, vector<1x8x4xf32>
    %181 = vector.shape_cast %180 : vector<1x8x4xf32> to vector<8x4xf32>
    %182 = vector.shape_cast %179 : vector<8x4xf32> to vector<1x8x4xf32>
    tpu.vector_store %arg14[%c1_99, %c0_100, %c0_101], %182 {strides = array<i32>} : memref<2x8x4xf32, #tpu.memory_space<vmem>>, vector<1x8x4xf32>,
    %c0_102 = arith.constant 0 : index
    %c0_103 = arith.constant 0 : index
    %183 = vector.load %arg9[%c0_102, %c0_103] : memref<8x16xf32, #tpu.memory_space<vmem>>, vector<8x16xf32>
    %cst_104 = arith.constant dense<0.000000e+00> : vector<4x16xf32>
    %184 = tpu.matmul %178, %183, %cst_104 {dimension_numbers = #tpu.dot_dimension_numbers<[1], [0], [0], [1], [0, 0, 1, 1], [], []>} : vector<4x8xf32>, vector<8x16xf32>, vector<4x16xf32> -> vector<4x16xf32>
    %c0_105 = arith.constant 0 : index
    %c0_106 = arith.constant 0 : index
    %185 = vector.load %arg10[%c0_105, %c0_106] : memref<1x16xf32, #tpu.memory_space<vmem>>, vector<1x16xf32>
    %186 = vector.broadcast %185 : vector<1x16xf32> to vector<4x16xf32>
    %187 = arith.addf %184, %186 : vector<4x16xf32>
    %cst_107 = arith.constant 5.000000e-01 : f32
    %188 = vector.broadcast %cst_107 : f32 to vector<4x16xf32>
    %189 = arith.mulf %188, %187 : vector<4x16xf32>
    %cst_108 = arith.constant 0.707106769 : f32
    %190 = vector.broadcast %cst_108 : f32 to vector<4x16xf32>
    %191 = arith.mulf %187, %190 : vector<4x16xf32>
    %192 = math.absf %191 : vector<4x16xf32>
    %cst_109 = arith.constant 0.327591091 : f32
    %193 = vector.broadcast %cst_109 : f32 to vector<4x16xf32>
    %194 = arith.mulf %193, %192 : vector<4x16xf32>
    %cst_110 = arith.constant 1.000000e+00 : f32
    %195 = vector.broadcast %cst_110 : f32 to vector<4x16xf32>
    %196 = arith.addf %195, %194 : vector<4x16xf32>
    %cst_111 = arith.constant 1.000000e+00 : f32
    %197 = vector.broadcast %cst_111 : f32 to vector<4x16xf32>
    %198 = arith.divf %197, %196 : vector<4x16xf32>
    %cst_112 = arith.constant 1.06140542 : f32
    %199 = vector.broadcast %cst_112 : f32 to vector<4x16xf32>
    %200 = arith.mulf %199, %198 : vector<4x16xf32>
    %cst_113 = arith.constant -1.45315206 : f32
    %201 = vector.broadcast %cst_113 : f32 to vector<4x16xf32>
    %202 = arith.addf %200, %201 : vector<4x16xf32>
    %203 = arith.mulf %202, %198 : vector<4x16xf32>
    %cst_114 = arith.constant 1.42141378 : f32
    %204 = vector.broadcast %cst_114 : f32 to vector<4x16xf32>
    %205 = arith.addf %203, %204 : vector<4x16xf32>
    %206 = arith.mulf %205, %198 : vector<4x16xf32>
    %cst_115 = arith.constant -0.284496725 : f32
    %207 = vector.broadcast %cst_115 : f32 to vector<4x16xf32>
    %208 = arith.addf %206, %207 : vector<4x16xf32>
    %209 = arith.mulf %208, %198 : vector<4x16xf32>
    %cst_116 = arith.constant 0.254829586 : f32
    %210 = vector.broadcast %cst_116 : f32 to vector<4x16xf32>
    %211 = arith.addf %209, %210 : vector<4x16xf32>
    %212 = arith.mulf %211, %198 : vector<4x16xf32>
    %cst_117 = arith.constant 0.000000e+00 : f32
    %213 = vector.broadcast %cst_117 : f32 to vector<4x16xf32>
    %214 = arith.subf %213, %192 : vector<4x16xf32>
    %215 = arith.mulf %214, %192 : vector<4x16xf32>
    %216 = math.exp %215 : vector<4x16xf32>
    %217 = arith.mulf %212, %216 : vector<4x16xf32>
    %cst_118 = arith.constant 1.000000e+00 : f32
    %218 = vector.broadcast %cst_118 : f32 to vector<4x16xf32>
    %219 = arith.subf %218, %217 : vector<4x16xf32>
    %cst_119 = arith.constant 0.000000e+00 : f32
    %220 = vector.broadcast %cst_119 : f32 to vector<4x16xf32>
    %221 = arith.cmpf oge, %191, %220 : vector<4x16xf32>
    %cst_120 = arith.constant 0.000000e+00 : f32
    %222 = vector.broadcast %cst_120 : f32 to vector<4x16xf32>
    %223 = arith.subf %222, %219 : vector<4x16xf32>
    %224 = arith.select %221, %219, %223 : vector<4x16xi1>, vector<4x16xf32>
    %cst_121 = arith.constant 1.000000e+00 : f32
    %225 = vector.broadcast %cst_121 : f32 to vector<4x16xf32>
    %226 = arith.addf %225, %224 : vector<4x16xf32>
    %227 = arith.mulf %189, %226 : vector<4x16xf32>
    %c0_122 = arith.constant 0 : index
    %c0_123 = arith.constant 0 : index
    %228 = vector.load %arg11[%c0_122, %c0_123] : memref<16x16xf32, #tpu.memory_space<vmem>>, vector<16x16xf32>
    %cst_124 = arith.constant dense<0.000000e+00> : vector<4x16xf32>
    %229 = tpu.matmul %227, %228, %cst_124 {dimension_numbers = #tpu.dot_dimension_numbers<[1], [0], [0], [1], [0, 0, 1, 1], [], []>} : vector<4x16xf32>, vector<16x16xf32>, vector<4x16xf32> -> vector<4x16xf32>
    %c0_125 = arith.constant 0 : index
    %c0_126 = arith.constant 0 : index
    %230 = vector.load %arg12[%c0_125, %c0_126] : memref<1x16xf32, #tpu.memory_space<vmem>>, vector<1x16xf32>
    %231 = vector.broadcast %230 : vector<1x16xf32> to vector<4x16xf32>
    %232 = arith.addf %229, %231 : vector<4x16xf32>
    %c1_127 = arith.constant 1 : index
    %c0_128 = arith.constant 0 : index
    %c0_129 = arith.constant 0 : index
    %233 = vector.load %arg4[%c1_127, %c0_128, %c0_129] : memref<2x4x16xf32, #tpu.memory_space<vmem>>, vector<1x4x16xf32>
    %234 = vector.shape_cast %233 : vector<1x4x16xf32> to vector<4x16xf32>
    %235 = arith.addf %234, %232 : vector<4x16xf32>
    %236 = tpu.transpose %235, [1, 0] : vector<4x16xf32> -> vector<16x4xf32>
    %c1_130 = arith.constant 1 : index
    %c0_131 = arith.constant 0 : index
    %c0_132 = arith.constant 0 : index
    %237 = vector.load %arg15[%c1_130, %c0_131, %c0_132] : memref<2x16x4xf32, #tpu.memory_space<vmem>>, vector<1x16x4xf32>
    %238 = vector.shape_cast %237 : vector<1x16x4xf32> to vector<16x4xf32>
    %239 = vector.shape_cast %236 : vector<16x4xf32> to vector<1x16x4xf32>
    tpu.vector_store %arg15[%c1_130, %c0_131, %c0_132], %239 {strides = array<i32>} : memref<2x16x4xf32, #tpu.memory_space<vmem>>, vector<1x16x4xf32>,
    return
  }
  func.func @transform_0(%arg0: i32, %arg1: i32) -> (i32, i32, i32) {
    %c0_i32 = arith.constant 0 : i32
    %c0_i32_0 = arith.constant 0 : i32
    return %arg0, %arg1, %c0_i32 : i32, i32, i32
  }
  func.func @transform_1(%arg0: i32, %arg1: i32) -> (i32, i32, i32) {
    %c0_i32 = arith.constant 0 : i32
    %c0_i32_0 = arith.constant 0 : i32
    return %arg0, %arg1, %c0_i32 : i32, i32, i32
  }
  func.func @transform_2(%arg0: i32, %arg1: i32) -> (i32, i32, i32) {
    %c0_i32 = arith.constant 0 : i32
    %c0_i32_0 = arith.constant 0 : i32
    return %arg0, %arg1, %c0_i32 : i32, i32, i32
  }
  func.func @transform_3(%arg0: i32, %arg1: i32) -> (i32, i32) {
    %c0_i32 = arith.constant 0 : i32
    %c0_i32_0 = arith.constant 0 : i32
    %c0_i32_1 = arith.constant 0 : i32
    return %c0_i32, %c0_i32_0 : i32, i32
  }
  func.func @transform_4(%arg0: i32, %arg1: i32) -> (i32, i32) {
    %c0_i32 = arith.constant 0 : i32
    %c0_i32_0 = arith.constant 0 : i32
    %c0_i32_1 = arith.constant 0 : i32
    return %c0_i32, %c0_i32_0 : i32, i32
  }
  func.func @transform_5(%arg0: i32, %arg1: i32) -> (i32, i32) {
    %c0_i32 = arith.constant 0 : i32
    %c0_i32_0 = arith.constant 0 : i32
    %c0_i32_1 = arith.constant 0 : i32
    return %c0_i32, %c0_i32_0 : i32, i32
  }
  func.func @transform_6(%arg0: i32, %arg1: i32) -> (i32, i32) {
    %c0_i32 = arith.constant 0 : i32
    %c0_i32_0 = arith.constant 0 : i32
    %c0_i32_1 = arith.constant 0 : i32
    return %c0_i32, %c0_i32_0 : i32, i32
  }
  func.func @transform_7(%arg0: i32, %arg1: i32) -> (i32, i32) {
    %c0_i32 = arith.constant 0 : i32
    %c0_i32_0 = arith.constant 0 : i32
    %c0_i32_1 = arith.constant 0 : i32
    return %c0_i32, %c0_i32_0 : i32, i32
  }
  func.func @transform_8(%arg0: i32, %arg1: i32) -> (i32, i32) {
    %c0_i32 = arith.constant 0 : i32
    %c0_i32_0 = arith.constant 0 : i32
    %c0_i32_1 = arith.constant 0 : i32
    return %c0_i32, %c0_i32_0 : i32, i32
  }
  func.func @transform_9(%arg0: i32, %arg1: i32) -> (i32, i32) {
    %c0_i32 = arith.constant 0 : i32
    %c0_i32_0 = arith.constant 0 : i32
    %c0_i32_1 = arith.constant 0 : i32
    return %c0_i32, %c0_i32_0 : i32, i32
  }
  func.func @transform_10(%arg0: i32, %arg1: i32) -> (i32, i32) {
    %c0_i32 = arith.constant 0 : i32
    %c0_i32_0 = arith.constant 0 : i32
    %c0_i32_1 = arith.constant 0 : i32
    return %c0_i32, %c0_i32_0 : i32, i32
  }
  func.func @transform_11(%arg0: i32, %arg1: i32) -> (i32, i32, i32) {
    %c0_i32 = arith.constant 0 : i32
    %c0_i32_0 = arith.constant 0 : i32
    return %arg0, %c0_i32, %arg1 : i32, i32, i32
  }
  func.func @transform_12(%arg0: i32, %arg1: i32) -> (i32, i32, i32) {
    %c0_i32 = arith.constant 0 : i32
    %c0_i32_0 = arith.constant 0 : i32
    return %arg0, %c0_i32, %arg1 : i32, i32, i32
  }
  func.func @transform_13(%arg0: i32, %arg1: i32) -> (i32, i32, i32) {
    %c0_i32 = arith.constant 0 : i32
    %c0_i32_0 = arith.constant 0 : i32
    return %arg0, %c0_i32, %arg1 : i32, i32, i32
  }
}

</mosaic_0001>

<llo_original>
// kernel: tpu_custom_call.1
$region0: #{tpu_custom_call.1}
  #allocation0 [shape = 'u32[]', space=smem, size = 0x4, offset = 0x4, fixed_abs, tag = 'smem constant byte address 0x4 - core index']
  #allocation1 [shape = 'u32[144,128]{1,0:T(1,128)}', space=vmem, size = 0x12000, scoped, tag = 'internal scratch']
  %s0 = inlined_call_operand.hbm [shape: f32[2,4,4], index: 0, kind: input, shape index: {}]
  %s1 = inlined_call_operand.hbm [shape: f32[2,4,8], index: 1, kind: input, shape index: {}]
  %s2 = inlined_call_operand.hbm [shape: f32[2,4,16], index: 2, kind: input, shape index: {}]
  %s3 = inlined_call_operand.vmem [shape: f32[4,8], index: 3, kind: input, shape index: {}]
  %s4 = inlined_call_operand.vmem [shape: f32[1,8], index: 4, kind: input, shape index: {}]
  %s5 = inlined_call_operand.vmem [shape: f32[8,8], index: 5, kind: input, shape index: {}]
  %s6 = inlined_call_operand.vmem [shape: f32[1,8], index: 6, kind: input, shape index: {}]
  %s7 = inlined_call_operand.hbm [shape: f32[8,16], index: 7, kind: input, shape index: {}]
  %s8 = inlined_call_operand.hbm [shape: f32[1,16], index: 8, kind: input, shape index: {}]
  %s9 = inlined_call_operand.vmem [shape: f32[16,16], index: 9, kind: input, shape index: {}]
  %s10 = inlined_call_operand.vmem [shape: f32[1,16], index: 10, kind: input, shape index: {}]
  %s11 = inlined_call_operand.hbm [shape: f32[2,4,4], index: 11, kind: output, shape index: {0}]
  %s12 = inlined_call_operand.vmem [shape: f32[2,8,4], index: 12, kind: output, shape index: {1}]
  %s13 = inlined_call_operand.vmem [shape: f32[2,16,4], index: 13, kind: output, shape index: {2}]
  %14 = xla_tuple %s11, %s12, %s13
  %s15 = sld [smem:[#allocation0]]
  $region90: #{tpu_custom_call.1} parent=0
    _
  %s17 = ssub.s32 1, %s15
  %s18 = scalar_select 0, %s17, %s15
  $region1: #{tpu_custom_call.1} parent=0
    #allocation2 [shape = 'u8[4096]{0}', space=vmem, size = 0x1000, scoped, tag = 'input window, operand 0, single buffered']
    #allocation3 [shape = 's32[1]{0}', space=sflag, size = 0x4, scoped, tag = 'scoped memory for tpu_custom_call.1']
    #allocation4 [shape = 's32[1]{0}', space=sflag, size = 0x4, scoped, tag = 'scoped memory for tpu_custom_call.1']
    #allocation5 [shape = 'u8[4096]{0}', space=vmem, size = 0x1000, scoped, tag = 'input window, operand 1, single buffered']
    #allocation6 [shape = 's32[1]{0}', space=sflag, size = 0x4, scoped, tag = 'scoped memory for tpu_custom_call.1']
    #allocation7 [shape = 'u8[4096]{0}', space=vmem, size = 0x1000, scoped, tag = 'input window, operand 2, single buffered']
    #allocation8 [shape = 'u8[4096]{0}', space=vmem, size = 0x1000, scoped, tag = 'input window, operand 7, single buffered']
    #allocation9 [shape = 's32[1]{0}', space=sflag, size = 0x4, scoped, tag = 'scoped memory for tpu_custom_call.1']
    #allocation10 [shape = 'u8[512]{0}', space=vmem, size = 0x400, scoped, tag = 'input window, operand 8, single buffered']
    #allocation11 [shape = 'u8[4096]{0}', space=vmem, size = 0x1000, scoped, tag = 'output window, operand 0, single buffered']
    %19 = vsyncpa [#allocation3], 0
    %20 = vsyncpa [#allocation6], 0
    %21 = vsyncpa [#allocation9], 0
    %22 = vsyncpa [#allocation4], 0
    // Predicated region
    $region2: #{tpu_custom_call.1} parent=1 // pred_check
      _
    $region3: #{tpu_custom_call.1} parent=1 // pred_check_branch
      %24 = sbr.rel (0) target = $region5
    $region4: #{tpu_custom_call.1} parent=1 // pred_region
      %s26 = ssub.s32 128, 128
      %27 = vsyncadd [#allocation3], %s26
      %s28 = sshll.u32 [#allocation2], 4
      %s29 = int_to_ptr.vmem [resolvable:$true] %s28
      %34 = dma.hbm_to_vmem [thread:$0]  %s0, 128, %s29, [#allocation3], 64, 64, 4
    $region5: #{tpu_custom_call.1} parent=1 // pred_fallthru
      _
    // Predicated region
    $region6: #{tpu_custom_call.1} parent=1 // pred_check
      _
    $region7: #{tpu_custom_call.1} parent=1 // pred_check_branch
      %36 = sbr.rel (0) target = $region9
    $region8: #{tpu_custom_call.1} parent=1 // pred_region
      %s38 = ssub.s32 128, 128
      %39 = vsyncadd [#allocation6], %s38
      %s40 = sshll.u32 [#allocation5], 4
      %s41 = int_to_ptr.vmem [resolvable:$true] %s40
      %46 = dma.hbm_to_vmem [thread:$0]  %s1, 128, %s41, [#allocation6], 64, 64, 4
    $region9: #{tpu_custom_call.1} parent=1 // pred_fallthru
      _
    // Predicated region
    $region10: #{tpu_custom_call.1} parent=1 // pred_check
      _
    $region11: #{tpu_custom_call.1} parent=1 // pred_check_branch
      %48 = sbr.rel (0) target = $region13
    $region12: #{tpu_custom_call.1} parent=1 // pred_region
      %s50 = ssub.s32 128, 128
      %51 = vsyncadd [#allocation6], %s50
      %s52 = sshll.u32 [#allocation7], 4
      %s53 = int_to_ptr.vmem [resolvable:$true] %s52
      %58 = dma.hbm_to_vmem [thread:$0]  %s2, 128, %s53, [#allocation6], 64, 64, 4
    $region13: #{tpu_custom_call.1} parent=1 // pred_fallthru
      _
    // Predicated region
    $region14: #{tpu_custom_call.1} parent=1 // pred_check
      _
    $region15: #{tpu_custom_call.1} parent=1 // pred_check_branch
      %60 = sbr.rel (0) target = $region17
    $region16: #{tpu_custom_call.1} parent=1 // pred_region
      _
    $region17: #{tpu_custom_call.1} parent=1 // pred_fallthru
      _
    // Predicated region
    $region18: #{tpu_custom_call.1} parent=1 // pred_check
      _
    $region19: #{tpu_custom_call.1} parent=1 // pred_check_branch
      %62 = sbr.rel (0) target = $region21
    $region20: #{tpu_custom_call.1} parent=1 // pred_region
      _
    $region21: #{tpu_custom_call.1} parent=1 // pred_fallthru
      _
    // Predicated region
    $region22: #{tpu_custom_call.1} parent=1 // pred_check
      _
    $region23: #{tpu_custom_call.1} parent=1 // pred_check_branch
      %64 = sbr.rel (0) target = $region25
    $region24: #{tpu_custom_call.1} parent=1 // pred_region
      _
    $region25: #{tpu_custom_call.1} parent=1 // pred_fallthru
      _
    // Predicated region
    $region26: #{tpu_custom_call.1} parent=1 // pred_check
      _
    $region27: #{tpu_custom_call.1} parent=1 // pred_check_branch
      %66 = sbr.rel (0) target = $region29
    $region28: #{tpu_custom_call.1} parent=1 // pred_region
      _
    $region29: #{tpu_custom_call.1} parent=1 // pred_fallthru
      _
    // Predicated region
    $region30: #{tpu_custom_call.1} parent=1 // pred_check
      _
    $region31: #{tpu_custom_call.1} parent=1 // pred_check_branch
      %68 = sbr.rel (0) target = $region33
    $region32: #{tpu_custom_call.1} parent=1 // pred_region
      %s70 = ssub.s32 128, 128
      %71 = vsyncadd [#allocation9], %s70
      %s73 = sshll.u32 [#allocation8], 4
      %s74 = int_to_ptr.vmem [resolvable:$true] %s73
      %76 = dma.hbm_to_vmem [thread:$0]  %s7, 128, %s74, [#allocation9]
    $region33: #{tpu_custom_call.1} parent=1 // pred_fallthru
      _
    // Predicated region
    $region34: #{tpu_custom_call.1} parent=1 // pred_check
      _
    $region35: #{tpu_custom_call.1} parent=1 // pred_check_branch
      %78 = sbr.rel (0) target = $region37
    $region36: #{tpu_custom_call.1} parent=1 // pred_region
      %s80 = ssub.s32 16, 16
      %81 = vsyncadd [#allocation9], %s80
      %s83 = sshll.u32 [#allocation10], 4
      %s84 = int_to_ptr.vmem [resolvable:$true] %s83
      %86 = dma.hbm_to_vmem [thread:$0]  %s8, 16, %s84, [#allocation9]
    $region37: #{tpu_custom_call.1} parent=1 // pred_fallthru
      _
    // Predicated region
    $region38: #{tpu_custom_call.1} parent=1 // pred_check
      _
    $region39: #{tpu_custom_call.1} parent=1 // pred_check_branch
      %88 = sbr.rel (0) target = $region41
    $region40: #{tpu_custom_call.1} parent=1 // pred_region
      _
    $region41: #{tpu_custom_call.1} parent=1 // pred_fallthru
      _
    // Predicated region
    $region42: #{tpu_custom_call.1} parent=1 // pred_check
      _
    $region43: #{tpu_custom_call.1} parent=1 // pred_check_branch
      %90 = sbr.rel (0) target = $region45
    $region44: #{tpu_custom_call.1} parent=1 // pred_region
      _
    $region45: #{tpu_custom_call.1} parent=1 // pred_fallthru
      _
    // Predicated region
    $region46: #{tpu_custom_call.1} parent=1 // pred_check
      _
    $region47: #{tpu_custom_call.1} parent=1 // pred_check_branch
      %92 = sbr.rel (0) target = $region49
    $region48: #{tpu_custom_call.1} parent=1 // pred_region
      %93 = dma.done [#allocation3], 128
    $region49: #{tpu_custom_call.1} parent=1 // pred_fallthru
      _
    // Predicated region
    $region50: #{tpu_custom_call.1} parent=1 // pred_check
      _
    $region51: #{tpu_custom_call.1} parent=1 // pred_check_branch
      %95 = sbr.rel (0) target = $region53
    $region52: #{tpu_custom_call.1} parent=1 // pred_region
      %96 = dma.done [#allocation6], 128
    $region53: #{tpu_custom_call.1} parent=1 // pred_fallthru
      _
    // Predicated region
    $region54: #{tpu_custom_call.1} parent=1 // pred_check
      _
    $region55: #{tpu_custom_call.1} parent=1 // pred_check_branch
      %98 = sbr.rel (0) target = $region57
    $region56: #{tpu_custom_call.1} parent=1 // pred_region
      %99 = dma.done [#allocation6], 128
    $region57: #{tpu_custom_call.1} parent=1 // pred_fallthru
      _
    // Predicated region
    $region58: #{tpu_custom_call.1} parent=1 // pred_check
      _
    $region59: #{tpu_custom_call.1} parent=1 // pred_check_branch
      %101 = sbr.rel (0) target = $region61
    $region60: #{tpu_custom_call.1} parent=1 // pred_region
      %102 = dma.done [#allocation9], 128
    $region61: #{tpu_custom_call.1} parent=1 // pred_fallthru
      _
    // Predicated region
    $region62: #{tpu_custom_call.1} parent=1 // pred_check
      _
    $region63: #{tpu_custom_call.1} parent=1 // pred_check_branch
      %104 = sbr.rel (0) target = $region65
    $region64: #{tpu_custom_call.1} parent=1 // pred_region
      %105 = dma.done [#allocation9], 16
    $region65: #{tpu_custom_call.1} parent=1 // pred_fallthru
      _
    %v106 = vld [vmem:[#allocation2] sm:$0xf]
    %107 = vxpose.xlu0.b32.start [1/16] %v106, 128
    %108 = vxpose.xlu0.b32.cont [2/16] 0.0, 128
    %109 = vxpose.xlu0.b32.cont [3/16] 0.0, 128
    %110 = vxpose.xlu0.b32.cont [4/16] 0.0, 128
    %111 = vxpose.xlu0.b32.cont [5/16] 0.0, 128
    %112 = vxpose.xlu0.b32.cont [6/16] 0.0, 128
    %113 = vxpose.xlu0.b32.cont [7/16] 0.0, 128
    %114 = vxpose.xlu0.b32.cont [8/16] 0.0, 128
    %115 = vxpose.xlu0.b32.cont [9/16] 0.0, 128
    %116 = vxpose.xlu0.b32.cont [10/16] 0.0, 128
    %117 = vxpose.xlu0.b32.cont [11/16] 0.0, 128
    %118 = vxpose.xlu0.b32.cont [12/16] 0.0, 128
    %119 = vxpose.xlu0.b32.cont [13/16] 0.0, 128
    %120 = vxpose.xlu0.b32.cont [14/16] 0.0, 128
    %121 = vxpose.xlu0.b32.cont [15/16] 0.0, 128
    %122 = vxpose.xlu0.b32.end [16/16] 0.0, 128
    %v123 = vpop.trf.xlu0
    %v124 = vpop.trf.xlu0
    %v125 = vpop.trf.xlu0
    %v126 = vpop.trf.xlu0
    %v127 = vpop.trf.xlu0
    %v128 = vpop.trf.xlu0
    %v129 = vpop.trf.xlu0
    %v130 = vpop.trf.xlu0
    %v131 = vpop.trf.xlu0
    %v132 = vpop.trf.xlu0
    %v133 = vpop.trf.xlu0
    %v134 = vpop.trf.xlu0
    %v135 = vpop.trf.xlu0
    %v136 = vpop.trf.xlu0
    %v137 = vpop.trf.xlu0
    %v138 = vpop.trf.xlu0
    %vm139 = vcmask 27648
    %140 = vst.msk [vmem:[#allocation11] sm:$0xf] %vm139, %v123
    %v141 = vld [vmem:[%s3] sm:$0xf]
    %v142 = vld [vmem:[%s4] sm:$0x1]
    %v144 = vlaneseq
    %v145 = vshrl.u32 %v144, 7
    %v146 = vsub.s32 0, %v145
    %v147 = vrot.slane %v142, %v146
    %vm149 = vcmask 31744
    %v151 = vsel %vm149, %v106, 0
    %vm153 = vcmask 1043456
    %v155 = vsel %vm153, %v141, 0
    %157 = vmatprep.subr.mxu0 0.0
    %158 = vmatpush1.msra.mxu0 %v155
    %159 = vmatprep.subr.mxu0 0.0
    %160 = vmatpush1.msra.mxu0 0.0
    %161 = vmatprep.subr.mxu0 0.0
    %162 = vmatpush1.msra.mxu0 0.0
    %163 = vmatprep.subr.mxu0 0.0
    %164 = vmatpush1.msra.mxu0 0.0
    %165 = vmatprep.subr.mxu0 0.0
    %166 = vmatpush1.msra.mxu0 0.0
    %167 = vmatprep.subr.mxu0 0.0
    %168 = vmatpush1.msra.mxu0 0.0
    %169 = vmatprep.subr.mxu0 0.0
    %170 = vmatpush1.msra.mxu0 0.0
    %171 = vmatprep.subr.mxu0 0.0
    %172 = vmatpush1.msra.mxu0 0.0
    %173 = vmatprep.subr.mxu0 0.0
    %174 = vmatpush1.msra.mxu0 0.0
    %175 = vmatprep.subr.mxu0 0.0
    %176 = vmatpush1.msra.mxu0 0.0
    %177 = vmatprep.subr.mxu0 0.0
    %178 = vmatpush1.msra.mxu0 0.0
    %179 = vmatprep.subr.mxu0 0.0
    %180 = vmatpush1.msra.mxu0 0.0
    %181 = vmatprep.subr.mxu0 0.0
    %182 = vmatpush1.msra.mxu0 0.0
    %183 = vmatprep.subr.mxu0 0.0
    %184 = vmatpush1.msra.mxu0 0.0
    %185 = vmatprep.subr.mxu0 0.0
    %186 = vmatpush1.msra.mxu0 0.0
    %187 = vmatprep.subr.mxu0 0.0
    %188 = vmatpush1.msra.mxu0 0.0
    %189 = vmatprep.subr.mxu0 0.0
    %190 = vmatpush1.msra.mxu0 0.0
    %191 = vmatprep.subr.mxu0 0.0
    %192 = vmatpush1.msra.mxu0 0.0
    %193 = vmatprep.subr.mxu0 0.0
    %194 = vmatpush1.msra.mxu0 0.0
    %195 = vmatprep.subr.mxu0 0.0
    %196 = vmatpush1.msra.mxu0 0.0
    %197 = vmatprep.subr.mxu0 0.0
    %198 = vmatpush1.msra.mxu0 0.0
    %199 = vmatprep.subr.mxu0 0.0
    %200 = vmatpush1.msra.mxu0 0.0
    %201 = vmatprep.subr.mxu0 0.0
    %202 = vmatpush1.msra.mxu0 0.0
    %203 = vmatprep.subr.mxu0 0.0
    %204 = vmatpush1.msra.mxu0 0.0
    %205 = vmatprep.subr.mxu0 0.0
    %206 = vmatpush1.msra.mxu0 0.0
    %207 = vmatprep.subr.mxu0 0.0
    %208 = vmatpush1.msra.mxu0 0.0
    %209 = vmatprep.subr.mxu0 0.0
    %210 = vmatpush1.msra.mxu0 0.0
    %211 = vmatprep.subr.mxu0 0.0
    %212 = vmatpush1.msra.mxu0 0.0
    %213 = vmatprep.subr.mxu0 0.0
    %214 = vmatpush1.msra.mxu0 0.0
    %215 = vmatprep.subr.mxu0 0.0
    %216 = vmatpush1.msra.mxu0 0.0
    %217 = vmatprep.subr.mxu0 0.0
    %218 = vmatpush1.msra.mxu0 0.0
    %219 = vmatprep.subr.mxu0 0.0
    %220 = vmatpush1.msra.mxu0 0.0
    %221 = vmatprep.mubr.f32.mxu0 0.0
    %222 = vmatmul.mubr.f32.gmra.mrb[0].mxu0 %v151
    %v223 = vpop.f32.mrb[0].mxu0
    %v224 = vadd.f32 %v147, %v223
    %v225 = vpop.f32.mrb[0].mxu0
    %226 = vdwg.mxu0
    %v227 = vmul.f32 %v224, 0.5
    %v228 = vmul.f32 %v224, 0.70710677
    %v229 = vand.u32 2147483647, %v228
    %v230 = vmul.f32 %v229, 0.3275911
    %v231 = vadd.f32 %v230, 1.0
    %v232 = vrcp.pop %v231
    %v233 = vmul.f32 1.0, %v232
    %v234 = vmul.f32 %v233, 1.0614054
    %v235 = vadd.f32 %v234, -1.4531521
    %v236 = vmul.f32 %v235, %v233
    %v237 = vadd.f32 %v236, 1.4214138
    %v238 = vmul.f32 %v237, %v233
    %v239 = vadd.f32 %v238, -0.28449672
    %v240 = vmul.f32 %v239, %v233
    %v241 = vadd.f32 %v240, 0.2548296
    %v242 = vmul.f32 %v241, %v233
    %v243 = vsub.f32 0.0, %v229
    %v244 = vmul.f32 %v243, %v229
    %v245 = vmul.f32 %v244, 1.442695
    %v246 = vpow.pop %v245
    %v247 = vmul.f32 %v242, %v246
    %v248 = vsub.f32 1.0, %v247
    %vm249 = vcmp.ge.f32.partialorder %v228, 0.0
    %v250 = vsub.f32 0.0, %v248
    %v251 = vsel %vm249, %v248, %v250
    %v252 = vadd.f32 %v251, 1.0
    %v253 = vmul.f32 %v227, %v252
    %v254 = vld [vmem:[%s5] sm:$0xff]
    %v255 = vld [vmem:[%s6] sm:$0x1]
    %v257 = vlaneseq
    %v258 = vshrl.u32 %v257, 7
    %v259 = vsub.s32 0, %v258
    %v260 = vrot.slane %v255, %v259
    %vm262 = vcmask 64512
    %v264 = vsel %vm262, %v253, 0
    %266 = vmatprep.subr.mxu0 0.0
    %267 = vmatpush1.msra.mxu0 %v254
    %268 = vmatprep.subr.mxu0 0.0
    %269 = vmatpush1.msra.mxu0 0.0
    %270 = vmatprep.subr.mxu0 0.0
    %271 = vmatpush1.msra.mxu0 0.0
    %272 = vmatprep.subr.mxu0 0.0
    %273 = vmatpush1.msra.mxu0 0.0
    %274 = vmatprep.subr.mxu0 0.0
    %275 = vmatpush1.msra.mxu0 0.0
    %276 = vmatprep.subr.mxu0 0.0
    %277 = vmatpush1.msra.mxu0 0.0
    %278 = vmatprep.subr.mxu0 0.0
    %279 = vmatpush1.msra.mxu0 0.0
    %280 = vmatprep.subr.mxu0 0.0
    %281 = vmatpush1.msra.mxu0 0.0
    %282 = vmatprep.subr.mxu0 0.0
    %283 = vmatpush1.msra.mxu0 0.0
    %284 = vmatprep.subr.mxu0 0.0
    %285 = vmatpush1.msra.mxu0 0.0
    %286 = vmatprep.subr.mxu0 0.0
    %287 = vmatpush1.msra.mxu0 0.0
    %288 = vmatprep.subr.mxu0 0.0
    %289 = vmatpush1.msra.mxu0 0.0
    %290 = vmatprep.subr.mxu0 0.0
    %291 = vmatpush1.msra.mxu0 0.0
    %292 = vmatprep.subr.mxu0 0.0
    %293 = vmatpush1.msra.mxu0 0.0
    %294 = vmatprep.subr.mxu0 0.0
    %295 = vmatpush1.msra.mxu0 0.0
    %296 = vmatprep.subr.mxu0 0.0
    %297 = vmatpush1.msra.mxu0 0.0
    %298 = vmatprep.subr.mxu0 0.0
    %299 = vmatpush1.msra.mxu0 0.0
    %300 = vmatprep.subr.mxu0 0.0
    %301 = vmatpush1.msra.mxu0 0.0
    %302 = vmatprep.subr.mxu0 0.0
    %303 = vmatpush1.msra.mxu0 0.0
    %304 = vmatprep.subr.mxu0 0.0
    %305 = vmatpush1.msra.mxu0 0.0
    %306 = vmatprep.subr.mxu0 0.0
    %307 = vmatpush1.msra.mxu0 0.0
    %308 = vmatprep.subr.mxu0 0.0
    %309 = vmatpush1.msra.mxu0 0.0
    %310 = vmatprep.subr.mxu0 0.0
    %311 = vmatpush1.msra.mxu0 0.0
    %312 = vmatprep.subr.mxu0 0.0
    %313 = vmatpush1.msra.mxu0 0.0
    %314 = vmatprep.subr.mxu0 0.0
    %315 = vmatpush1.msra.mxu0 0.0
    %316 = vmatprep.subr.mxu0 0.0
    %317 = vmatpush1.msra.mxu0 0.0
    %318 = vmatprep.subr.mxu0 0.0
    %319 = vmatpush1.msra.mxu0 0.0
    %320 = vmatprep.subr.mxu0 0.0
    %321 = vmatpush1.msra.mxu0 0.0
    %322 = vmatprep.subr.mxu0 0.0
    %323 = vmatpush1.msra.mxu0 0.0
    %324 = vmatprep.subr.mxu0 0.0
    %325 = vmatpush1.msra.mxu0 0.0
    %326 = vmatprep.subr.mxu0 0.0
    %327 = vmatpush1.msra.mxu0 0.0
    %328 = vmatprep.subr.mxu0 0.0
    %329 = vmatpush1.msra.mxu0 0.0
    %330 = vmatprep.mubr.f32.mxu0 0.0
    %331 = vmatmul.mubr.f32.gmra.mrb[0].mxu0 %v264
    %v332 = vpop.f32.mrb[0].mxu0
    %v333 = vadd.f32 %v260, %v332
    %v334 = vpop.f32.mrb[0].mxu0
    %335 = vdwg.mxu0
    %v336 = vld [vmem:[#allocation5] sm:$0xf]
    %v337 = vadd.f32 %v336, %v333
    %338 = vxpose.xlu0.b32.start [1/16] %v337, 128
    %339 = vxpose.xlu0.b32.cont [2/16] 0.0, 128
    %340 = vxpose.xlu0.b32.cont [3/16] 0.0, 128
    %341 = vxpose.xlu0.b32.cont [4/16] 0.0, 128
    %342 = vxpose.xlu0.b32.cont [5/16] 0.0, 128
    %343 = vxpose.xlu0.b32.cont [6/16] 0.0, 128
    %344 = vxpose.xlu0.b32.cont [7/16] 0.0, 128
    %345 = vxpose.xlu0.b32.cont [8/16] 0.0, 128
    %346 = vxpose.xlu0.b32.cont [9/16] 0.0, 128
    %347 = vxpose.xlu0.b32.cont [10/16] 0.0, 128
    %348 = vxpose.xlu0.b32.cont [11/16] 0.0, 128
    %349 = vxpose.xlu0.b32.cont [12/16] 0.0, 128
    %350 = vxpose.xlu0.b32.cont [13/16] 0.0, 128
    %351 = vxpose.xlu0.b32.cont [14/16] 0.0, 128
    %352 = vxpose.xlu0.b32.cont [15/16] 0.0, 128
    %353 = vxpose.xlu0.b32.end [16/16] 0.0, 128
    %v354 = vpop.trf.xlu0
    %v355 = vpop.trf.xlu0
    %v356 = vpop.trf.xlu0
    %v357 = vpop.trf.xlu0
    %v358 = vpop.trf.xlu0
    %v359 = vpop.trf.xlu0
    %v360 = vpop.trf.xlu0
    %v361 = vpop.trf.xlu0
    %v362 = vpop.trf.xlu0
    %v363 = vpop.trf.xlu0
    %v364 = vpop.trf.xlu0
    %v365 = vpop.trf.xlu0
    %v366 = vpop.trf.xlu0
    %v367 = vpop.trf.xlu0
    %v368 = vpop.trf.xlu0
    %v369 = vpop.trf.xlu0
    %370 = vst.msk [vmem:[%s12] sm:$0xff] %vm149, %v354
    %v371 = vld [vmem:[#allocation8] sm:$0xff]
    %v372 = vld [vmem:[#allocation10] sm:$0x1]
    %v374 = vlaneseq
    %v375 = vshrl.u32 %v374, 7
    %v376 = vsub.s32 0, %v375
    %v377 = vrot.slane %v372, %v376
    %v380 = vsel %vm262, %v337, 0
    %382 = vmatprep.subr.mxu0 0.0
    %383 = vmatpush1.msra.mxu0 %v371
    %384 = vmatprep.subr.mxu0 0.0
    %385 = vmatpush1.msra.mxu0 0.0
    %386 = vmatprep.subr.mxu0 0.0
    %387 = vmatpush1.msra.mxu0 0.0
    %388 = vmatprep.subr.mxu0 0.0
    %389 = vmatpush1.msra.mxu0 0.0
    %390 = vmatprep.subr.mxu0 0.0
    %391 = vmatpush1.msra.mxu0 0.0
    %392 = vmatprep.subr.mxu0 0.0
    %393 = vmatpush1.msra.mxu0 0.0
    %394 = vmatprep.subr.mxu0 0.0
    %395 = vmatpush1.msra.mxu0 0.0
    %396 = vmatprep.subr.mxu0 0.0
    %397 = vmatpush1.msra.mxu0 0.0
    %398 = vmatprep.subr.mxu0 0.0
    %399 = vmatpush1.msra.mxu0 0.0
    %400 = vmatprep.subr.mxu0 0.0
    %401 = vmatpush1.msra.mxu0 0.0
    %402 = vmatprep.subr.mxu0 0.0
    %403 = vmatpush1.msra.mxu0 0.0
    %404 = vmatprep.subr.mxu0 0.0
    %405 = vmatpush1.msra.mxu0 0.0
    %406 = vmatprep.subr.mxu0 0.0
    %407 = vmatpush1.msra.mxu0 0.0
    %408 = vmatprep.subr.mxu0 0.0
    %409 = vmatpush1.msra.mxu0 0.0
    %410 = vmatprep.subr.mxu0 0.0
    %411 = vmatpush1.msra.mxu0 0.0
    %412 = vmatprep.subr.mxu0 0.0
    %413 = vmatpush1.msra.mxu0 0.0
    %414 = vmatprep.subr.mxu0 0.0
    %415 = vmatpush1.msra.mxu0 0.0
    %416 = vmatprep.subr.mxu0 0.0
    %417 = vmatpush1.msra.mxu0 0.0
    %418 = vmatprep.subr.mxu0 0.0
    %419 = vmatpush1.msra.mxu0 0.0
    %420 = vmatprep.subr.mxu0 0.0
    %421 = vmatpush1.msra.mxu0 0.0
    %422 = vmatprep.subr.mxu0 0.0
    %423 = vmatpush1.msra.mxu0 0.0
    %424 = vmatprep.subr.mxu0 0.0
    %425 = vmatpush1.msra.mxu0 0.0
    %426 = vmatprep.subr.mxu0 0.0
    %427 = vmatpush1.msra.mxu0 0.0
    %428 = vmatprep.subr.mxu0 0.0
    %429 = vmatpush1.msra.mxu0 0.0
    %430 = vmatprep.subr.mxu0 0.0
    %431 = vmatpush1.msra.mxu0 0.0
    %432 = vmatprep.subr.mxu0 0.0
    %433 = vmatpush1.msra.mxu0 0.0
    %434 = vmatprep.subr.mxu0 0.0
    %435 = vmatpush1.msra.mxu0 0.0
    %436 = vmatprep.subr.mxu0 0.0
    %437 = vmatpush1.msra.mxu0 0.0
    %438 = vmatprep.subr.mxu0 0.0
    %439 = vmatpush1.msra.mxu0 0.0
    %440 = vmatprep.subr.mxu0 0.0
    %441 = vmatpush1.msra.mxu0 0.0
    %442 = vmatprep.subr.mxu0 0.0
    %443 = vmatpush1.msra.mxu0 0.0
    %444 = vmatprep.subr.mxu0 0.0
    %445 = vmatpush1.msra.mxu0 0.0
    %446 = vmatprep.mubr.f32.mxu0 0.0
    %447 = vmatmul.mubr.f32.gmra.mrb[0].mxu0 %v380
    %v448 = vpop.f32.mrb[0].mxu0
    %v449 = vadd.f32 %v377, %v448
    %v450 = vpop.f32.mrb[0].mxu0
    %451 = vdwg.mxu0
    %v452 = vmul.f32 %v449, 0.5
    %v453 = vmul.f32 %v449, 0.70710677
    %v454 = vand.u32 2147483647, %v453
    %v455 = vmul.f32 %v454, 0.3275911
    %v456 = vadd.f32 %v455, 1.0
    %v457 = vrcp.pop %v456
    %v458 = vmul.f32 1.0, %v457
    %v459 = vmul.f32 %v458, 1.0614054
    %v460 = vadd.f32 %v459, -1.4531521
    %v461 = vmul.f32 %v460, %v458
    %v462 = vadd.f32 %v461, 1.4214138
    %v463 = vmul.f32 %v462, %v458
    %v464 = vadd.f32 %v463, -0.28449672
    %v465 = vmul.f32 %v464, %v458
    %v466 = vadd.f32 %v465, 0.2548296
    %v467 = vmul.f32 %v466, %v458
    %v468 = vsub.f32 0.0, %v454
    %v469 = vmul.f32 %v468, %v454
    %v470 = vmul.f32 %v469, 1.442695
    %v471 = vpow.pop %v470
    %v472 = vmul.f32 %v467, %v471
    %v473 = vsub.f32 1.0, %v472
    %vm474 = vcmp.ge.f32.partialorder %v453, 0.0
    %v475 = vsub.f32 0.0, %v473
    %v476 = vsel %vm474, %v473, %v475
    %v477 = vadd.f32 %v476, 1.0
    %v478 = vmul.f32 %v452, %v477
    %v479 = vld [vmem:[%s9] sm:$0xff]
    %v480 = vld [vmem:[%s9 + $0x8] sm:$0xff]
    %v481 = vld [vmem:[%s10] sm:$0x1]
    %v483 = vlaneseq
    %v484 = vshrl.u32 %v483, 7
    %v485 = vsub.s32 0, %v484
    %v486 = vrot.slane %v481, %v485
    %vm488 = vcmask 130048
    %v490 = vsel %vm488, %v478, 0
    %492 = vmatprep.subr.mxu0 0.0
    %493 = vmatpush1.msra.mxu0 %v479
    %494 = vmatprep.subr.mxu0 0.0
    %495 = vmatpush1.msra.mxu0 %v480
    %496 = vmatprep.subr.mxu0 0.0
    %497 = vmatpush1.msra.mxu0 0.0
    %498 = vmatprep.subr.mxu0 0.0
    %499 = vmatpush1.msra.mxu0 0.0
    %500 = vmatprep.subr.mxu0 0.0
    %501 = vmatpush1.msra.mxu0 0.0
    %502 = vmatprep.subr.mxu0 0.0
    %503 = vmatpush1.msra.mxu0 0.0
    %504 = vmatprep.subr.mxu0 0.0
    %505 = vmatpush1.msra.mxu0 0.0
    %506 = vmatprep.subr.mxu0 0.0
    %507 = vmatpush1.msra.mxu0 0.0
    %508 = vmatprep.subr.mxu0 0.0
    %509 = vmatpush1.msra.mxu0 0.0
    %510 = vmatprep.subr.mxu0 0.0
    %511 = vmatpush1.msra.mxu0 0.0
    %512 = vmatprep.subr.mxu0 0.0
    %513 = vmatpush1.msra.mxu0 0.0
    %514 = vmatprep.subr.mxu0 0.0
    %515 = vmatpush1.msra.mxu0 0.0
    %516 = vmatprep.subr.mxu0 0.0
    %517 = vmatpush1.msra.mxu0 0.0
    %518 = vmatprep.subr.mxu0 0.0
    %519 = vmatpush1.msra.mxu0 0.0
    %520 = vmatprep.subr.mxu0 0.0
    %521 = vmatpush1.msra.mxu0 0.0
    %522 = vmatprep.subr.mxu0 0.0
    %523 = vmatpush1.msra.mxu0 0.0
    %524 = vmatprep.subr.mxu0 0.0
    %525 = vmatpush1.msra.mxu0 0.0
    %526 = vmatprep.subr.mxu0 0.0
    %527 = vmatpush1.msra.mxu0 0.0
    %528 = vmatprep.subr.mxu0 0.0
    %529 = vmatpush1.msra.mxu0 0.0
    %530 = vmatprep.subr.mxu0 0.0
    %531 = vmatpush1.msra.mxu0 0.0
    %532 = vmatprep.subr.mxu0 0.0
    %533 = vmatpush1.msra.mxu0 0.0
    %534 = vmatprep.subr.mxu0 0.0
    %535 = vmatpush1.msra.mxu0 0.0
    %536 = vmatprep.subr.mxu0 0.0
    %537 = vmatpush1.msra.mxu0 0.0
    %538 = vmatprep.subr.mxu0 0.0
    %539 = vmatpush1.msra.mxu0 0.0
    %540 = vmatprep.subr.mxu0 0.0
    %541 = vmatpush1.msra.mxu0 0.0
    %542 = vmatprep.subr.mxu0 0.0
    %543 = vmatpush1.msra.mxu0 0.0
    %544 = vmatprep.subr.mxu0 0.0
    %545 = vmatpush1.msra.mxu0 0.0
    %546 = vmatprep.subr.mxu0 0.0
    %547 = vmatpush1.msra.mxu0 0.0
    %548 = vmatprep.subr.mxu0 0.0
    %549 = vmatpush1.msra.mxu0 0.0
    %550 = vmatprep.subr.mxu0 0.0
    %551 = vmatpush1.msra.mxu0 0.0
    %552 = vmatprep.subr.mxu0 0.0
    %553 = vmatpush1.msra.mxu0 0.0
    %554 = vmatprep.subr.mxu0 0.0
    %555 = vmatpush1.msra.mxu0 0.0
    %556 = vmatprep.mubr.f32.mxu0 0.0
    %557 = vmatmul.mubr.f32.gmra.mrb[0].mxu0 %v490
    %v558 = vpop.f32.mrb[0].mxu0
    %v559 = vadd.f32 %v486, %v558
    %v560 = vpop.f32.mrb[0].mxu0
    %561 = vdwg.mxu0
    %v562 = vld [vmem:[#allocation7] sm:$0xf]
    %v563 = vadd.f32 %v562, %v559
    %564 = vxpose.xlu0.b32.start [1/16] %v563, 128
    %565 = vxpose.xlu0.b32.cont [2/16] 0.0, 128
    %566 = vxpose.xlu0.b32.cont [3/16] 0.0, 128
    %567 = vxpose.xlu0.b32.cont [4/16] 0.0, 128
    %568 = vxpose.xlu0.b32.cont [5/16] 0.0, 128
    %569 = vxpose.xlu0.b32.cont [6/16] 0.0, 128
    %570 = vxpose.xlu0.b32.cont [7/16] 0.0, 128
    %571 = vxpose.xlu0.b32.cont [8/16] 0.0, 128
    %572 = vxpose.xlu0.b32.cont [9/16] 0.0, 128
    %573 = vxpose.xlu0.b32.cont [10/16] 0.0, 128
    %574 = vxpose.xlu0.b32.cont [11/16] 0.0, 128
    %575 = vxpose.xlu0.b32.cont [12/16] 0.0, 128
    %576 = vxpose.xlu0.b32.cont [13/16] 0.0, 128
    %577 = vxpose.xlu0.b32.cont [14/16] 0.0, 128
    %578 = vxpose.xlu0.b32.cont [15/16] 0.0, 128
    %579 = vxpose.xlu0.b32.end [16/16] 0.0, 128
    %v580 = vpop.trf.xlu0
    %v581 = vpop.trf.xlu0
    %v582 = vpop.trf.xlu0
    %v583 = vpop.trf.xlu0
    %v584 = vpop.trf.xlu0
    %v585 = vpop.trf.xlu0
    %v586 = vpop.trf.xlu0
    %v587 = vpop.trf.xlu0
    %v588 = vpop.trf.xlu0
    %v589 = vpop.trf.xlu0
    %v590 = vpop.trf.xlu0
    %v591 = vpop.trf.xlu0
    %v592 = vpop.trf.xlu0
    %v593 = vpop.trf.xlu0
    %v594 = vpop.trf.xlu0
    %v595 = vpop.trf.xlu0
    %596 = vst.msk [vmem:[%s13] sm:$0xff] %vm149, %v580
    %597 = vst.msk [vmem:[%s13 + $0x8] sm:$0xff] %vm149, %v581
    %s598 = scalar_lea.vmem [#allocation2], 4
    %v599 = vld [vmem:[%s598] sm:$0xf]
    %600 = vxpose.xlu0.b32.start [1/16] %v599, 128
    %601 = vxpose.xlu0.b32.cont [2/16] 0.0, 128
    %602 = vxpose.xlu0.b32.cont [3/16] 0.0, 128
    %603 = vxpose.xlu0.b32.cont [4/16] 0.0, 128
    %604 = vxpose.xlu0.b32.cont [5/16] 0.0, 128
    %605 = vxpose.xlu0.b32.cont [6/16] 0.0, 128
    %606 = vxpose.xlu0.b32.cont [7/16] 0.0, 128
    %607 = vxpose.xlu0.b32.cont [8/16] 0.0, 128
    %608 = vxpose.xlu0.b32.cont [9/16] 0.0, 128
    %609 = vxpose.xlu0.b32.cont [10/16] 0.0, 128
    %610 = vxpose.xlu0.b32.cont [11/16] 0.0, 128
    %611 = vxpose.xlu0.b32.cont [12/16] 0.0, 128
    %612 = vxpose.xlu0.b32.cont [13/16] 0.0, 128
    %613 = vxpose.xlu0.b32.cont [14/16] 0.0, 128
    %614 = vxpose.xlu0.b32.cont [15/16] 0.0, 128
    %615 = vxpose.xlu0.b32.end [16/16] 0.0, 128
    %v616 = vpop.trf.xlu0
    %v617 = vpop.trf.xlu0
    %v618 = vpop.trf.xlu0
    %v619 = vpop.trf.xlu0
    %v620 = vpop.trf.xlu0
    %v621 = vpop.trf.xlu0
    %v622 = vpop.trf.xlu0
    %v623 = vpop.trf.xlu0
    %v624 = vpop.trf.xlu0
    %v625 = vpop.trf.xlu0
    %v626 = vpop.trf.xlu0
    %v627 = vpop.trf.xlu0
    %v628 = vpop.trf.xlu0
    %v629 = vpop.trf.xlu0
    %v630 = vpop.trf.xlu0
    %v631 = vpop.trf.xlu0
    %s632 = scalar_lea.vmem [#allocation11], 4
    %633 = vst.msk [vmem:[%s632] sm:$0xf] %vm139, %v616
    %v634 = vld [vmem:[%s3] sm:$0xf]
    %v635 = vld [vmem:[%s4] sm:$0x1]
    %v637 = vlaneseq
    %v638 = vshrl.u32 %v637, 7
    %v639 = vsub.s32 0, %v638
    %v640 = vrot.slane %v635, %v639
    %v643 = vsel %vm149, %v599, 0
    %v646 = vsel %vm153, %v634, 0
    %648 = vmatprep.subr.mxu0 0.0
    %649 = vmatpush1.msra.mxu0 %v646
    %650 = vmatprep.subr.mxu0 0.0
    %651 = vmatpush1.msra.mxu0 0.0
    %652 = vmatprep.subr.mxu0 0.0
    %653 = vmatpush1.msra.mxu0 0.0
    %654 = vmatprep.subr.mxu0 0.0
    %655 = vmatpush1.msra.mxu0 0.0
    %656 = vmatprep.subr.mxu0 0.0
    %657 = vmatpush1.msra.mxu0 0.0
    %658 = vmatprep.subr.mxu0 0.0
    %659 = vmatpush1.msra.mxu0 0.0
    %660 = vmatprep.subr.mxu0 0.0
    %661 = vmatpush1.msra.mxu0 0.0
    %662 = vmatprep.subr.mxu0 0.0
    %663 = vmatpush1.msra.mxu0 0.0
    %664 = vmatprep.subr.mxu0 0.0
    %665 = vmatpush1.msra.mxu0 0.0
    %666 = vmatprep.subr.mxu0 0.0
    %667 = vmatpush1.msra.mxu0 0.0
    %668 = vmatprep.subr.mxu0 0.0
    %669 = vmatpush1.msra.mxu0 0.0
    %670 = vmatprep.subr.mxu0 0.0
    %671 = vmatpush1.msra.mxu0 0.0
    %672 = vmatprep.subr.mxu0 0.0
    %673 = vmatpush1.msra.mxu0 0.0
    %674 = vmatprep.subr.mxu0 0.0
    %675 = vmatpush1.msra.mxu0 0.0
    %676 = vmatprep.subr.mxu0 0.0
    %677 = vmatpush1.msra.mxu0 0.0
    %678 = vmatprep.subr.mxu0 0.0
    %679 = vmatpush1.msra.mxu0 0.0
    %680 = vmatprep.subr.mxu0 0.0
    %681 = vmatpush1.msra.mxu0 0.0
    %682 = vmatprep.subr.mxu0 0.0
    %683 = vmatpush1.msra.mxu0 0.0
    %684 = vmatprep.subr.mxu0 0.0
    %685 = vmatpush1.msra.mxu0 0.0
    %686 = vmatprep.subr.mxu0 0.0
    %687 = vmatpush1.msra.mxu0 0.0
    %688 = vmatprep.subr.mxu0 0.0
    %689 = vmatpush1.msra.mxu0 0.0
    %690 = vmatprep.subr.mxu0 0.0
    %691 = vmatpush1.msra.mxu0 0.0
    %692 = vmatprep.subr.mxu0 0.0
    %693 = vmatpush1.msra.mxu0 0.0
    %694 = vmatprep.subr.mxu0 0.0
    %695 = vmatpush1.msra.mxu0 0.0
    %696 = vmatprep.subr.mxu0 0.0
    %697 = vmatpush1.msra.mxu0 0.0
    %698 = vmatprep.subr.mxu0 0.0
    %699 = vmatpush1.msra.mxu0 0.0
    %700 = vmatprep.subr.mxu0 0.0
    %701 = vmatpush1.msra.mxu0 0.0
    %702 = vmatprep.subr.mxu0 0.0
    %703 = vmatpush1.msra.mxu0 0.0
    %704 = vmatprep.subr.mxu0 0.0
    %705 = vmatpush1.msra.mxu0 0.0
    %706 = vmatprep.subr.mxu0 0.0
    %707 = vmatpush1.msra.mxu0 0.0
    %708 = vmatprep.subr.mxu0 0.0
    %709 = vmatpush1.msra.mxu0 0.0
    %710 = vmatprep.subr.mxu0 0.0
    %711 = vmatpush1.msra.mxu0 0.0
    %712 = vmatprep.mubr.f32.mxu0 0.0
    %713 = vmatmul.mubr.f32.gmra.mrb[0].mxu0 %v643
    %v714 = vpop.f32.mrb[0].mxu0
    %v715 = vadd.f32 %v640, %v714
    %v716 = vpop.f32.mrb[0].mxu0
    %717 = vdwg.mxu0
    %v718 = vmul.f32 %v715, 0.5
    %v719 = vmul.f32 %v715, 0.70710677
    %v720 = vand.u32 2147483647, %v719
    %v721 = vmul.f32 %v720, 0.3275911
    %v722 = vadd.f32 %v721, 1.0
    %v723 = vrcp.pop %v722
    %v724 = vmul.f32 1.0, %v723
    %v725 = vmul.f32 %v724, 1.0614054
    %v726 = vadd.f32 %v725, -1.4531521
    %v727 = vmul.f32 %v726, %v724
    %v728 = vadd.f32 %v727, 1.4214138
    %v729 = vmul.f32 %v728, %v724
    %v730 = vadd.f32 %v729, -0.28449672
    %v731 = vmul.f32 %v730, %v724
    %v732 = vadd.f32 %v731, 0.2548296
    %v733 = vmul.f32 %v732, %v724
    %v734 = vsub.f32 0.0, %v720
    %v735 = vmul.f32 %v734, %v720
    %v736 = vmul.f32 %v735, 1.442695
    %v737 = vpow.pop %v736
    %v738 = vmul.f32 %v733, %v737
    %v739 = vsub.f32 1.0, %v738
    %vm740 = vcmp.ge.f32.partialorder %v719, 0.0
    %v741 = vsub.f32 0.0, %v739
    %v742 = vsel %vm740, %v739, %v741
    %v743 = vadd.f32 %v742, 1.0
    %v744 = vmul.f32 %v718, %v743
    %v745 = vld [vmem:[%s5] sm:$0xff]
    %v746 = vld [vmem:[%s6] sm:$0x1]
    %v748 = vlaneseq
    %v749 = vshrl.u32 %v748, 7
    %v750 = vsub.s32 0, %v749
    %v751 = vrot.slane %v746, %v750
    %v754 = vsel %vm262, %v744, 0
    %756 = vmatprep.subr.mxu0 0.0
    %757 = vmatpush1.msra.mxu0 %v745
    %758 = vmatprep.subr.mxu0 0.0
    %759 = vmatpush1.msra.mxu0 0.0
    %760 = vmatprep.subr.mxu0 0.0
    %761 = vmatpush1.msra.mxu0 0.0
    %762 = vmatprep.subr.mxu0 0.0
    %763 = vmatpush1.msra.mxu0 0.0
    %764 = vmatprep.subr.mxu0 0.0
    %765 = vmatpush1.msra.mxu0 0.0
    %766 = vmatprep.subr.mxu0 0.0
    %767 = vmatpush1.msra.mxu0 0.0
    %768 = vmatprep.subr.mxu0 0.0
    %769 = vmatpush1.msra.mxu0 0.0
    %770 = vmatprep.subr.mxu0 0.0
    %771 = vmatpush1.msra.mxu0 0.0
    %772 = vmatprep.subr.mxu0 0.0
    %773 = vmatpush1.msra.mxu0 0.0
    %774 = vmatprep.subr.mxu0 0.0
    %775 = vmatpush1.msra.mxu0 0.0
    %776 = vmatprep.subr.mxu0 0.0
    %777 = vmatpush1.msra.mxu0 0.0
    %778 = vmatprep.subr.mxu0 0.0
    %779 = vmatpush1.msra.mxu0 0.0
    %780 = vmatprep.subr.mxu0 0.0
    %781 = vmatpush1.msra.mxu0 0.0
    %782 = vmatprep.subr.mxu0 0.0
    %783 = vmatpush1.msra.mxu0 0.0
    %784 = vmatprep.subr.mxu0 0.0
    %785 = vmatpush1.msra.mxu0 0.0
    %786 = vmatprep.subr.mxu0 0.0
    %787 = vmatpush1.msra.mxu0 0.0
    %788 = vmatprep.subr.mxu0 0.0
    %789 = vmatpush1.msra.mxu0 0.0
    %790 = vmatprep.subr.mxu0 0.0
    %791 = vmatpush1.msra.mxu0 0.0
    %792 = vmatprep.subr.mxu0 0.0
    %793 = vmatpush1.msra.mxu0 0.0
    %794 = vmatprep.subr.mxu0 0.0
    %795 = vmatpush1.msra.mxu0 0.0
    %796 = vmatprep.subr.mxu0 0.0
    %797 = vmatpush1.msra.mxu0 0.0
    %798 = vmatprep.subr.mxu0 0.0
    %799 = vmatpush1.msra.mxu0 0.0
    %800 = vmatprep.subr.mxu0 0.0
    %801 = vmatpush1.msra.mxu0 0.0
    %802 = vmatprep.subr.mxu0 0.0
    %803 = vmatpush1.msra.mxu0 0.0
    %804 = vmatprep.subr.mxu0 0.0
    %805 = vmatpush1.msra.mxu0 0.0
    %806 = vmatprep.subr.mxu0 0.0
    %807 = vmatpush1.msra.mxu0 0.0
    %808 = vmatprep.subr.mxu0 0.0
    %809 = vmatpush1.msra.mxu0 0.0
    %810 = vmatprep.subr.mxu0 0.0
    %811 = vmatpush1.msra.mxu0 0.0
    %812 = vmatprep.subr.mxu0 0.0
    %813 = vmatpush1.msra.mxu0 0.0
    %814 = vmatprep.subr.mxu0 0.0
    %815 = vmatpush1.msra.mxu0 0.0
    %816 = vmatprep.subr.mxu0 0.0
    %817 = vmatpush1.msra.mxu0 0.0
    %818 = vmatprep.subr.mxu0 0.0
    %819 = vmatpush1.msra.mxu0 0.0
    %820 = vmatprep.mubr.f32.mxu0 0.0
    %821 = vmatmul.mubr.f32.gmra.mrb[0].mxu0 %v754
    %v822 = vpop.f32.mrb[0].mxu0
    %v823 = vadd.f32 %v751, %v822
    %v824 = vpop.f32.mrb[0].mxu0
    %825 = vdwg.mxu0
    %s826 = scalar_lea.vmem [#allocation5], 4
    %v827 = vld [vmem:[%s826] sm:$0xf]
    %v828 = vadd.f32 %v827, %v823
    %829 = vxpose.xlu0.b32.start [1/16] %v828, 128
    %830 = vxpose.xlu0.b32.cont [2/16] 0.0, 128
    %831 = vxpose.xlu0.b32.cont [3/16] 0.0, 128
    %832 = vxpose.xlu0.b32.cont [4/16] 0.0, 128
    %833 = vxpose.xlu0.b32.cont [5/16] 0.0, 128
    %834 = vxpose.xlu0.b32.cont [6/16] 0.0, 128
    %835 = vxpose.xlu0.b32.cont [7/16] 0.0, 128
    %836 = vxpose.xlu0.b32.cont [8/16] 0.0, 128
    %837 = vxpose.xlu0.b32.cont [9/16] 0.0, 128
    %838 = vxpose.xlu0.b32.cont [10/16] 0.0, 128
    %839 = vxpose.xlu0.b32.cont [11/16] 0.0, 128
    %840 = vxpose.xlu0.b32.cont [12/16] 0.0, 128
    %841 = vxpose.xlu0.b32.cont [13/16] 0.0, 128
    %842 = vxpose.xlu0.b32.cont [14/16] 0.0, 128
    %843 = vxpose.xlu0.b32.cont [15/16] 0.0, 128
    %844 = vxpose.xlu0.b32.end [16/16] 0.0, 128
    %v845 = vpop.trf.xlu0
    %v846 = vpop.trf.xlu0
    %v847 = vpop.trf.xlu0
    %v848 = vpop.trf.xlu0
    %v849 = vpop.trf.xlu0
    %v850 = vpop.trf.xlu0
    %v851 = vpop.trf.xlu0
    %v852 = vpop.trf.xlu0
    %v853 = vpop.trf.xlu0
    %v854 = vpop.trf.xlu0
    %v855 = vpop.trf.xlu0
    %v856 = vpop.trf.xlu0
    %v857 = vpop.trf.xlu0
    %v858 = vpop.trf.xlu0
    %v859 = vpop.trf.xlu0
    %v860 = vpop.trf.xlu0
    %s861 = scalar_lea.vmem %s12, 8
    %862 = vst.msk [vmem:[%s861] sm:$0xff] %vm149, %v845
    %v863 = vld [vmem:[#allocation8] sm:$0xff]
    %v864 = vld [vmem:[#allocation10] sm:$0x1]
    %v866 = vlaneseq
    %v867 = vshrl.u32 %v866, 7
    %v868 = vsub.s32 0, %v867
    %v869 = vrot.slane %v864, %v868
    %v872 = vsel %vm262, %v828, 0
    %874 = vmatprep.subr.mxu0 0.0
    %875 = vmatpush1.msra.mxu0 %v863
    %876 = vmatprep.subr.mxu0 0.0
    %877 = vmatpush1.msra.mxu0 0.0
    %878 = vmatprep.subr.mxu0 0.0
    %879 = vmatpush1.msra.mxu0 0.0
    %880 = vmatprep.subr.mxu0 0.0
    %881 = vmatpush1.msra.mxu0 0.0
    %882 = vmatprep.subr.mxu0 0.0
    %883 = vmatpush1.msra.mxu0 0.0
    %884 = vmatprep.subr.mxu0 0.0
    %885 = vmatpush1.msra.mxu0 0.0
    %886 = vmatprep.subr.mxu0 0.0
    %887 = vmatpush1.msra.mxu0 0.0
    %888 = vmatprep.subr.mxu0 0.0
    %889 = vmatpush1.msra.mxu0 0.0
    %890 = vmatprep.subr.mxu0 0.0
    %891 = vmatpush1.msra.mxu0 0.0
    %892 = vmatprep.subr.mxu0 0.0
    %893 = vmatpush1.msra.mxu0 0.0
    %894 = vmatprep.subr.mxu0 0.0
    %895 = vmatpush1.msra.mxu0 0.0
    %896 = vmatprep.subr.mxu0 0.0
    %897 = vmatpush1.msra.mxu0 0.0
    %898 = vmatprep.subr.mxu0 0.0
    %899 = vmatpush1.msra.mxu0 0.0
    %900 = vmatprep.subr.mxu0 0.0
    %901 = vmatpush1.msra.mxu0 0.0
    %902 = vmatprep.subr.mxu0 0.0
    %903 = vmatpush1.msra.mxu0 0.0
    %904 = vmatprep.subr.mxu0 0.0
    %905 = vmatpush1.msra.mxu0 0.0
    %906 = vmatprep.subr.mxu0 0.0
    %907 = vmatpush1.msra.mxu0 0.0
    %908 = vmatprep.subr.mxu0 0.0
    %909 = vmatpush1.msra.mxu0 0.0
    %910 = vmatprep.subr.mxu0 0.0
    %911 = vmatpush1.msra.mxu0 0.0
    %912 = vmatprep.subr.mxu0 0.0
    %913 = vmatpush1.msra.mxu0 0.0
    %914 = vmatprep.subr.mxu0 0.0
    %915 = vmatpush1.msra.mxu0 0.0
    %916 = vmatprep.subr.mxu0 0.0
    %917 = vmatpush1.msra.mxu0 0.0
    %918 = vmatprep.subr.mxu0 0.0
    %919 = vmatpush1.msra.mxu0 0.0
    %920 = vmatprep.subr.mxu0 0.0
    %921 = vmatpush1.msra.mxu0 0.0
    %922 = vmatprep.subr.mxu0 0.0
    %923 = vmatpush1.msra.mxu0 0.0
    %924 = vmatprep.subr.mxu0 0.0
    %925 = vmatpush1.msra.mxu0 0.0
    %926 = vmatprep.subr.mxu0 0.0
    %927 = vmatpush1.msra.mxu0 0.0
    %928 = vmatprep.subr.mxu0 0.0
    %929 = vmatpush1.msra.mxu0 0.0
    %930 = vmatprep.subr.mxu0 0.0
    %931 = vmatpush1.msra.mxu0 0.0
    %932 = vmatprep.subr.mxu0 0.0
    %933 = vmatpush1.msra.mxu0 0.0
    %934 = vmatprep.subr.mxu0 0.0
    %935 = vmatpush1.msra.mxu0 0.0
    %936 = vmatprep.subr.mxu0 0.0
    %937 = vmatpush1.msra.mxu0 0.0
    %938 = vmatprep.mubr.f32.mxu0 0.0
    %939 = vmatmul.mubr.f32.gmra.mrb[0].mxu0 %v872
    %v940 = vpop.f32.mrb[0].mxu0
    %v941 = vadd.f32 %v869, %v940
    %v942 = vpop.f32.mrb[0].mxu0
    %943 = vdwg.mxu0
    %v944 = vmul.f32 %v941, 0.5
    %v945 = vmul.f32 %v941, 0.70710677
    %v946 = vand.u32 2147483647, %v945
    %v947 = vmul.f32 %v946, 0.3275911
    %v948 = vadd.f32 %v947, 1.0
    %v949 = vrcp.pop %v948
    %v950 = vmul.f32 1.0, %v949
    %v951 = vmul.f32 %v950, 1.0614054
    %v952 = vadd.f32 %v951, -1.4531521
    %v953 = vmul.f32 %v952, %v950
    %v954 = vadd.f32 %v953, 1.4214138
    %v955 = vmul.f32 %v954, %v950
    %v956 = vadd.f32 %v955, -0.28449672
    %v957 = vmul.f32 %v956, %v950
    %v958 = vadd.f32 %v957, 0.2548296
    %v959 = vmul.f32 %v958, %v950
    %v960 = vsub.f32 0.0, %v946
    %v961 = vmul.f32 %v960, %v946
    %v962 = vmul.f32 %v961, 1.442695
    %v963 = vpow.pop %v962
    %v964 = vmul.f32 %v959, %v963
    %v965 = vsub.f32 1.0, %v964
    %vm966 = vcmp.ge.f32.partialorder %v945, 0.0
    %v967 = vsub.f32 0.0, %v965
    %v968 = vsel %vm966, %v965, %v967
    %v969 = vadd.f32 %v968, 1.0
    %v970 = vmul.f32 %v944, %v969
    %v971 = vld [vmem:[%s9] sm:$0xff]
    %v972 = vld [vmem:[%s9 + $0x8] sm:$0xff]
    %v973 = vld [vmem:[%s10] sm:$0x1]
    %v975 = vlaneseq
    %v976 = vshrl.u32 %v975, 7
    %v977 = vsub.s32 0, %v976
    %v978 = vrot.slane %v973, %v977
    %v981 = vsel %vm488, %v970, 0
    %983 = vmatprep.subr.mxu0 0.0
    %984 = vmatpush1.msra.mxu0 %v971
    %985 = vmatprep.subr.mxu0 0.0
    %986 = vmatpush1.msra.mxu0 %v972
    %987 = vmatprep.subr.mxu0 0.0
    %988 = vmatpush1.msra.mxu0 0.0
    %989 = vmatprep.subr.mxu0 0.0
    %990 = vmatpush1.msra.mxu0 0.0
    %991 = vmatprep.subr.mxu0 0.0
    %992 = vmatpush1.msra.mxu0 0.0
    %993 = vmatprep.subr.mxu0 0.0
    %994 = vmatpush1.msra.mxu0 0.0
    %995 = vmatprep.subr.mxu0 0.0
    %996 = vmatpush1.msra.mxu0 0.0
    %997 = vmatprep.subr.mxu0 0.0
    %998 = vmatpush1.msra.mxu0 0.0
    %999 = vmatprep.subr.mxu0 0.0
    %1000 = vmatpush1.msra.mxu0 0.0
    %1001 = vmatprep.subr.mxu0 0.0
    %1002 = vmatpush1.msra.mxu0 0.0
    %1003 = vmatprep.subr.mxu0 0.0
    %1004 = vmatpush1.msra.mxu0 0.0
    %1005 = vmatprep.subr.mxu0 0.0
    %1006 = vmatpush1.msra.mxu0 0.0
    %1007 = vmatprep.subr.mxu0 0.0
    %1008 = vmatpush1.msra.mxu0 0.0
    %1009 = vmatprep.subr.mxu0 0.0
    %1010 = vmatpush1.msra.mxu0 0.0
    %1011 = vmatprep.subr.mxu0 0.0
    %1012 = vmatpush1.msra.mxu0 0.0
    %1013 = vmatprep.subr.mxu0 0.0
    %1014 = vmatpush1.msra.mxu0 0.0
    %1015 = vmatprep.subr.mxu0 0.0
    %1016 = vmatpush1.msra.mxu0 0.0
    %1017 = vmatprep.subr.mxu0 0.0
    %1018 = vmatpush1.msra.mxu0 0.0
    %1019 = vmatprep.subr.mxu0 0.0
    %1020 = vmatpush1.msra.mxu0 0.0
    %1021 = vmatprep.subr.mxu0 0.0
    %1022 = vmatpush1.msra.mxu0 0.0
    %1023 = vmatprep.subr.mxu0 0.0
    %1024 = vmatpush1.msra.mxu0 0.0
    %1025 = vmatprep.subr.mxu0 0.0
    %1026 = vmatpush1.msra.mxu0 0.0
    %1027 = vmatprep.subr.mxu0 0.0
    %1028 = vmatpush1.msra.mxu0 0.0
    %1029 = vmatprep.subr.mxu0 0.0
    %1030 = vmatpush1.msra.mxu0 0.0
    %1031 = vmatprep.subr.mxu0 0.0
    %1032 = vmatpush1.msra.mxu0 0.0
    %1033 = vmatprep.subr.mxu0 0.0
    %1034 = vmatpush1.msra.mxu0 0.0
    %1035 = vmatprep.subr.mxu0 0.0
    %1036 = vmatpush1.msra.mxu0 0.0
    %1037 = vmatprep.subr.mxu0 0.0
    %1038 = vmatpush1.msra.mxu0 0.0
    %1039 = vmatprep.subr.mxu0 0.0
    %1040 = vmatpush1.msra.mxu0 0.0
    %1041 = vmatprep.subr.mxu0 0.0
    %1042 = vmatpush1.msra.mxu0 0.0
    %1043 = vmatprep.subr.mxu0 0.0
    %1044 = vmatpush1.msra.mxu0 0.0
    %1045 = vmatprep.subr.mxu0 0.0
    %1046 = vmatpush1.msra.mxu0 0.0
    %1047 = vmatprep.mubr.f32.mxu0 0.0
    %1048 = vmatmul.mubr.f32.gmra.mrb[0].mxu0 %v981
    %v1049 = vpop.f32.mrb[0].mxu0
    %v1050 = vadd.f32 %v978, %v1049
    %v1051 = vpop.f32.mrb[0].mxu0
    %1052 = vdwg.mxu0
    %s1053 = scalar_lea.vmem [#allocation7], 4
    %v1054 = vld [vmem:[%s1053] sm:$0xf]
    %v1055 = vadd.f32 %v1054, %v1050
    %1056 = vxpose.xlu0.b32.start [1/16] %v1055, 128
    %1057 = vxpose.xlu0.b32.cont [2/16] 0.0, 128
    %1058 = vxpose.xlu0.b32.cont [3/16] 0.0, 128
    %1059 = vxpose.xlu0.b32.cont [4/16] 0.0, 128
    %1060 = vxpose.xlu0.b32.cont [5/16] 0.0, 128
    %1061 = vxpose.xlu0.b32.cont [6/16] 0.0, 128
    %1062 = vxpose.xlu0.b32.cont [7/16] 0.0, 128
    %1063 = vxpose.xlu0.b32.cont [8/16] 0.0, 128
    %1064 = vxpose.xlu0.b32.cont [9/16] 0.0, 128
    %1065 = vxpose.xlu0.b32.cont [10/16] 0.0, 128
    %1066 = vxpose.xlu0.b32.cont [11/16] 0.0, 128
    %1067 = vxpose.xlu0.b32.cont [12/16] 0.0, 128
    %1068 = vxpose.xlu0.b32.cont [13/16] 0.0, 128
    %1069 = vxpose.xlu0.b32.cont [14/16] 0.0, 128
    %1070 = vxpose.xlu0.b32.cont [15/16] 0.0, 128
    %1071 = vxpose.xlu0.b32.end [16/16] 0.0, 128
    %v1072 = vpop.trf.xlu0
    %v1073 = vpop.trf.xlu0
    %v1074 = vpop.trf.xlu0
    %v1075 = vpop.trf.xlu0
    %v1076 = vpop.trf.xlu0
    %v1077 = vpop.trf.xlu0
    %v1078 = vpop.trf.xlu0
    %v1079 = vpop.trf.xlu0
    %v1080 = vpop.trf.xlu0
    %v1081 = vpop.trf.xlu0
    %v1082 = vpop.trf.xlu0
    %v1083 = vpop.trf.xlu0
    %v1084 = vpop.trf.xlu0
    %v1085 = vpop.trf.xlu0
    %v1086 = vpop.trf.xlu0
    %v1087 = vpop.trf.xlu0
    %s1088 = scalar_lea.vmem %s13, 16
    %1089 = vst.msk [vmem:[%s1088] sm:$0xff] %vm149, %v1072
    %1090 = vst.msk [vmem:[%s1088 + $0x8] sm:$0xff] %vm149, %v1073
    // Predicated region
    $region66: #{tpu_custom_call.1} parent=1 // pred_check
      _
    $region67: #{tpu_custom_call.1} parent=1 // pred_check_branch
      %1092 = sbr.rel (0) target = $region69
    $region68: #{tpu_custom_call.1} parent=1 // pred_region
      %s1094 = ssub.s32 128, 128
      %1095 = vsyncadd [#allocation4], %s1094
      %s1096 = sshll.u32 [#allocation11], 4
      %s1097 = int_to_ptr.vmem [resolvable:$true] %s1096
      %1102 = dma.vmem_to_hbm [thread:$0]  %s1097, 128, %s11, [#allocation4], 64, 64, 4
    $region69: #{tpu_custom_call.1} parent=1 // pred_fallthru
      _
    // Predicated region
    $region70: #{tpu_custom_call.1} parent=1 // pred_check
      _
    $region71: #{tpu_custom_call.1} parent=1 // pred_check_branch
      %1104 = sbr.rel (0) target = $region73
    $region72: #{tpu_custom_call.1} parent=1 // pred_region
      _
    $region73: #{tpu_custom_call.1} parent=1 // pred_fallthru
      _
    // Predicated region
    $region74: #{tpu_custom_call.1} parent=1 // pred_check
      _
    $region75: #{tpu_custom_call.1} parent=1 // pred_check_branch
      %1106 = sbr.rel (0) target = $region77
    $region76: #{tpu_custom_call.1} parent=1 // pred_region
      _
    $region77: #{tpu_custom_call.1} parent=1 // pred_fallthru
      _
    // Predicated region
    $region78: #{tpu_custom_call.1} parent=1 // pred_check
      _
    $region79: #{tpu_custom_call.1} parent=1 // pred_check_branch
      %1108 = sbr.rel (0) target = $region81
    $region80: #{tpu_custom_call.1} parent=1 // pred_region
      %1109 = dma.done [#allocation4], 128
    $region81: #{tpu_custom_call.1} parent=1 // pred_fallthru
      _
    // Predicated region
    $region82: #{tpu_custom_call.1} parent=1 // pred_check
      _
    $region83: #{tpu_custom_call.1} parent=1 // pred_check_branch
      %1111 = sbr.rel (0) target = $region85
    $region84: #{tpu_custom_call.1} parent=1 // pred_region
      _
    $region85: #{tpu_custom_call.1} parent=1 // pred_fallthru
      _
    // Predicated region
    $region86: #{tpu_custom_call.1} parent=1 // pred_check
      _
    $region87: #{tpu_custom_call.1} parent=1 // pred_check_branch
      %1113 = sbr.rel (0) target = $region89
    $region88: #{tpu_custom_call.1} parent=1 // pred_region
      _
    $region89: #{tpu_custom_call.1} parent=1 // pred_fallthru
      _
    %1114 = vsyncpa [#allocation3], 1
    %1115 = vsyncpa [#allocation6], 1
    %1116 = vsyncpa [#allocation9], 1
    %1117 = vsyncpa [#allocation4], 1

</llo_original>
